<compile_context>
chip_gen: v6e
topology: v6e:2x2x1
jax: 0.10.0
libtpu: 0.0.40
codegen_flags: <defaults>
</compile_context>

<pallas_src>
import functools
from math import sqrt

import jax
import jax.numpy as jnp
from jax import lax
from jax.experimental import pallas as pl
from jax.experimental.pallas import tpu as pltpu

_NEG_BIG = -1.0e30  # finite "minus infinity" for masking padded keys


def _round_up(x, m):
    return (x + m - 1) // m * m


def _attention_kernel(*refs, n_heads, d_k, d_v, s_valid, return_attention):
    """One grid step = (batch b, query-tile l), all heads.

    refs layout:
      inputs : q(1,Lt,D) k(1,Sp,D) v(1,Sp,D) wq bq wk bk wv bv wo bo
      outputs: out(1,Lt,D) [attn(1,H,Lt,Sp)]
      scratch: kf(Sp,H*dk) bf16, vf(Sp,H*dv) bf16, ctx(Lt,H*dv) f32
    """
    (q_ref, k_ref, v_ref,
     wq_ref, bq_ref, wk_ref, bk_ref, wv_ref, bv_ref,
     wo_ref, bo_ref) = refs[:11]
    if return_attention:
        out_ref, attn_ref = refs[11], refs[12]
        kf_sc, vf_sc, ctx_sc = refs[13:16]
    else:
        out_ref = refs[11]
        attn_ref = None
        kf_sc, vf_sc, ctx_sc = refs[12:15]

    l_idx = pl.program_id(1)
    s_pad = kf_sc.shape[0]
    l_tile = q_ref.shape[1]

    # K/V projections once per batch element; cached in VMEM scratch across the
    # sequential ("arbitrary") L-tile axis.
    @pl.when(l_idx == 0)
    def _():
        k = k_ref[0]                                                 # (Sp, D) bf16
        v = v_ref[0]
        kf = jnp.dot(k, wk_ref[...], preferred_element_type=jnp.float32) + bk_ref[...]
        vf = jnp.dot(v, wv_ref[...], preferred_element_type=jnp.float32) + bv_ref[...]
        kf_sc[...] = kf.astype(kf_sc.dtype)
        vf_sc[...] = vf.astype(vf_sc.dtype)

    # Fused Q projection for this tile (1/sqrt(dk) already folded into wq/bq).
    q = q_ref[0]                                                     # (Lt, D) bf16
    qf = (jnp.dot(q, wq_ref[...], preferred_element_type=jnp.float32)
          + bq_ref[...]).astype(jnp.bfloat16)                        # (Lt, H*dk)

    # Mask for zero-padded key columns (hoisted out of the head loop).
    if s_valid < s_pad:
        key_mask = lax.broadcasted_iota(jnp.int32, (l_tile, s_pad), 1) < s_valid
    else:
        key_mask = None

    for h in range(n_heads):                       # static unroll, static lane slices
        qh = qf[:, h * d_k:(h + 1) * d_k]          # (Lt, dk) bf16
        kh = kf_sc[:, h * d_k:(h + 1) * d_k]       # (Sp, dk) bf16
        vh = vf_sc[:, h * d_v:(h + 1) * d_v]       # (Sp, dv) bf16

        # Q @ K^T without materializing a transpose: contract last dims.
        s = lax.dot_general(qh, kh, (((1,), (1,)), ((), ())),
                            preferred_element_type=jnp.float32)      # (Lt, Sp) f32
        if key_mask is not None:
            s = jnp.where(key_mask, s, _NEG_BIG)

        # Numerically stable softmax in f32; reciprocal on the EUP.
        m = jnp.max(s, axis=-1, keepdims=True)
        e = jnp.exp(s - m)
        inv = pl.reciprocal(jnp.sum(e, axis=-1, keepdims=True), approx=True)
        a = e * inv                                                  # (Lt, Sp) f32

        if attn_ref is not None:
            attn_ref[0, h] = a

        # Per-head context accumulated into VMEM scratch at static lane offset.
        ctx_sc[:, h * d_v:(h + 1) * d_v] = jnp.dot(
            a.astype(jnp.bfloat16), vh, preferred_element_type=jnp.float32)

    # Single full-width output projection from the context scratch.
    out_ref[0] = (jnp.dot(ctx_sc[...].astype(jnp.bfloat16), wo_ref[...],
                          preferred_element_type=jnp.float32)
                  + bo_ref[...]).astype(out_ref.dtype)


def temporal_attention_layer(queries, keys, values, params, n_heads,
                             attn_mask=None, return_attention=False,
                             l_tile=128):
    """Forward pass of TemporalAttentionLayer.

    Weights are stored in (in, out) layout (already-transposed nn.Linear
    weights); biases are flat. Returns (out, attn) where attn is None when
    return_attention=False (FullAttention output_attention=False path).
    """
    del attn_mask  # TODO(synk): FullAttention(mask_flag=False) semantics only.
    B, L, d_model = queries.shape
    _, S, _ = keys.shape
    H = n_heads

    wq, bq = params["wq"], params["bq"]   # (d_model, H*dk), (H*dk,)
    wk, bk = params["wk"], params["bk"]
    wv, bv = params["wv"], params["bv"]
    wo, bo = params["wo"], params["bo"]   # (H*dv, d_model), (d_model,)

    dk = wq.shape[1] // H
    dv = wv.shape[1] // H

    # Tiling and lane-dense padding.
    Lt = min(l_tile, _round_up(L, 8))
    L_pad = _round_up(L, Lt)
    S_pad = _round_up(S, 128)
    n_l = L_pad // Lt

    # Pad activations and cast MXU operands to bf16.
    q_in = jnp.pad(queries, ((0, 0), (0, L_pad - L), (0, 0))).astype(jnp.bfloat16)
    k_in = jnp.pad(keys, ((0, 0), (0, S_pad - S), (0, 0))).astype(jnp.bfloat16)
    v_in = jnp.pad(values, ((0, 0), (0, S_pad - S), (0, 0))).astype(jnp.bfloat16)

    # Fold the 1/sqrt(dk) attention scale into the query projection (trace-time).
    scale = 1.0 / sqrt(dk)
    wq_s = (wq * scale).astype(jnp.bfloat16)
    wk_b = wk.astype(jnp.bfloat16)
    wv_b = wv.astype(jnp.bfloat16)
    wo_b = wo.astype(jnp.bfloat16)
    bq_s = (bq * scale).reshape(1, H * dk).astype(jnp.float32)
    bk_2d = bk.reshape(1, H * dk).astype(jnp.float32)
    bv_2d = bv.reshape(1, H * dv).astype(jnp.float32)
    bo_2d = bo.reshape(1, d_model).astype(jnp.float32)

    kernel = functools.partial(_attention_kernel, n_heads=H, d_k=dk, d_v=dv,
                               s_valid=S, return_attention=return_attention)

    q_map = lambda b, l: (b, l, 0)
    kv_map = lambda b, l: (b, 0, 0)    # constant in l -> no re-DMA across L tiles
    w_map = lambda b, l: (0, 0)        # constant -> VMEM-resident weights

    in_specs = [
        pl.BlockSpec((1, Lt, d_model), q_map),             # queries tile
        pl.BlockSpec((1, S_pad, d_model), kv_map),         # keys (per batch)
        pl.BlockSpec((1, S_pad, d_model), kv_map),         # values (per batch)
        pl.BlockSpec((d_model, H * dk), w_map),            # Wq (scaled, bf16)
        pl.BlockSpec((1, H * dk), w_map),                  # bq (scaled)
        pl.BlockSpec((d_model, H * dk), w_map),            # Wk
        pl.BlockSpec((1, H * dk), w_map),                  # bk
        pl.BlockSpec((d_model, H * dv), w_map),            # Wv
        pl.BlockSpec((1, H * dv), w_map),                  # bv
        pl.BlockSpec((H * dv, d_model), w_map),            # Wout
        pl.BlockSpec((1, d_model), w_map),                 # b_out
    ]

    out_spec_main = pl.BlockSpec((1, Lt, d_model), q_map)
    out_shape_main = jax.ShapeDtypeStruct((B, L_pad, d_model), jnp.float32)
    if return_attention:
        out_shape = (out_shape_main,
                     jax.ShapeDtypeStruct((B, H, L_pad, S_pad), jnp.float32))
        out_specs = (out_spec_main,
                     pl.BlockSpec((1, H, Lt, S_pad), lambda b, l: (b, 0, l, 0)))
    else:
        out_shape = out_shape_main
        out_specs = out_spec_main

    scratch_shapes = [
        pltpu.VMEM((S_pad, H * dk), jnp.bfloat16),   # projected K (cached per batch)
        pltpu.VMEM((S_pad, H * dv), jnp.bfloat16),   # projected V (cached per batch)
        pltpu.VMEM((Lt, H * dv), jnp.float32),       # per-tile context accumulator
    ]

    # VMEM budget: resident weights + scratch + double-buffered tiles + temps,
    # clamped to the physical per-core VMEM of the current chip.
    bf, f4 = 2, 4
    resident = (
        bf * (2 * d_model * H * dk + d_model * H * dv + H * dv * d_model)   # weights
        + f4 * (2 * H * dk + H * dv + d_model)                              # biases
        + bf * S_pad * (H * dk + H * dv)                                    # kf/vf scratch
        + f4 * Lt * H * dv                                                  # ctx scratch
    )
    per_step = (
        2 * bf * Lt * d_model                 # q tile, double-buffered
        + 2 * bf * 2 * S_pad * d_model        # k/v tiles, double-buffered
        + 2 * f4 * Lt * d_model               # out tile, double-buffered
        + f4 * Lt * H * dk                    # qf temporary
        + 4 * f4 * Lt * S_pad                 # live score / exp temporaries
        + 2 * f4 * S_pad * max(H * dk, H * dv)  # K/V projection f32 temps at l==0
    )
    if return_attention:
        per_step += 2 * f4 * H * Lt * S_pad   # attn tile, double-buffered
    est = resident + per_step
    try:
        vmem_cap = int(getattr(pltpu.get_tpu_info(), "vmem_capacity_bytes",
                               64 * 1024 * 1024))
    except Exception:
        vmem_cap = 64 * 1024 * 1024
    vmem_limit = int(min(max(est * 3 // 2, 32 * 1024 * 1024),
                         (vmem_cap * 7) // 8))

    result = pl.pallas_call(
        kernel,
        out_shape=out_shape,
        grid_spec=pltpu.PrefetchScalarGridSpec(
            num_scalar_prefetch=0,
            grid=(B, n_l),
            in_specs=in_specs,
            out_specs=out_specs,
            scratch_shapes=scratch_shapes,
        ),
        compiler_params=pltpu.CompilerParams(
            # batch "parallel" (megacore); L-tile "arbitrary" so the per-batch
            # K/V scratch caching at l==0 stays valid (sequential order).
            dimension_semantics=("parallel", "arbitrary"),
            vmem_limit_bytes=vmem_limit,
        ),
    )(q_in, k_in, v_in, wq_s, bq_s, wk_b, bk_2d, wv_b, bv_2d, wo_b, bo_2d)

    if return_attention:
        out, attn = result
        return out[:, :L, :], attn[:, :, :L, :S]
    return result[:, :L, :], None


def _reference(queries, keys, values, params, n_heads):
    """Pure-JAX f32 reference for correctness checking."""
    B, L, d_model = queries.shape
    _, S, _ = keys.shape
    H = n_heads
    q = queries @ params["wq"] + params["bq"]
    k = keys @ params["wk"] + params["bk"]
    v = values @ params["wv"] + params["bv"]
    dk = q.shape[-1] // H
    dv = v.shape[-1] // H
    q = q.reshape(B, L, H, dk)
    k = k.reshape(B, S, H, dk)
    v = v.reshape(B, S, H, dv)
    scores = jnp.einsum("blhd,bshd->bhls", q, k) / sqrt(dk)
    attn = jax.nn.softmax(scores, axis=-1)
    out = jnp.einsum("bhls,bshd->blhd", attn, v).reshape(B, L, H * dv)
    out = out @ params["wo"] + params["bo"]
    return out, attn


if __name__ == "__main__":
    B, L, S = 2, 8, 8
    d_model, n_heads = 32, 4
    dk = dv = d_model // n_heads

    key = jax.random.PRNGKey(0)
    ks = jax.random.split(key, 12)

    # Deterministic synthetic parameters. Weights in (in, out) layout
    # (already-transposed nn.Linear weights), biases flat.
    w_scale = 0.1
    params = {
        "wq": w_scale * jax.random.normal(ks[0], (d_model, n_heads * dk), jnp.float32),
        "bq": w_scale * jax.random.normal(ks[1], (n_heads * dk,), jnp.float32),
        "wk": w_scale * jax.random.normal(ks[2], (d_model, n_heads * dk), jnp.float32),
        "bk": w_scale * jax.random.normal(ks[3], (n_heads * dk,), jnp.float32),
        "wv": w_scale * jax.random.normal(ks[4], (d_model, n_heads * dv), jnp.float32),
        "bv": w_scale * jax.random.normal(ks[5], (n_heads * dv,), jnp.float32),
        "wo": w_scale * jax.random.normal(ks[6], (n_heads * dv, d_model), jnp.float32),
        "bo": w_scale * jax.random.normal(ks[7], (d_model,), jnp.float32),
    }

    queries = jax.random.normal(ks[8], (B, L, d_model), jnp.float32)
    keys_in = jax.random.normal(ks[9], (B, S, d_model), jnp.float32)
    values_in = jax.random.normal(ks[10], (B, S, d_model), jnp.float32)

    ref_out, ref_attn = _reference(queries, keys_in, values_in, params, n_heads)

    # Path 1: with attention probabilities (output_attention=True semantics).
    fwd_attn = jax.jit(functools.partial(temporal_attention_layer,
                                         n_heads=n_heads, return_attention=True))
    out1, attn1 = fwd_attn(queries, keys_in, values_in, params)
    jax.block_until_ready((out1, attn1))
    assert out1.shape == (B, L, d_model)
    assert attn1.shape == (B, n_heads, L, S)
    # bf16 MXU operands + approx reciprocal -> loosened tolerances.
    assert jnp.allclose(out1, ref_out, atol=3e-2, rtol=3e-2)
    assert jnp.allclose(attn1, ref_attn, atol=2e-2, rtol=2e-2)

    # Path 2: fast path without the attention-probability output.
    fwd = jax.jit(functools.partial(temporal_attention_layer,
                                    n_heads=n_heads, return_attention=False))
    out2, attn2 = fwd(queries, keys_in, values_in, params)
    jax.block_until_ready(out2)
    assert attn2 is None
    assert out2.shape == (B, L, d_model)
    assert jnp.allclose(out2, ref_out, atol=3e-2, rtol=3e-2)

    print("KERNEL_OK")
</pallas_src>

<mosaic_0001>
module attributes {stable_mosaic.version = 11 : i64} {
  func.func @_attention_kernel(%arg0: i32, %arg1: i32, %arg2: memref<1x8x32xbf16, #tpu.memory_space<vmem>>, %arg3: memref<1x128x32xbf16, #tpu.memory_space<vmem>>, %arg4: memref<1x128x32xbf16, #tpu.memory_space<vmem>>, %arg5: memref<32x32xbf16, #tpu.memory_space<vmem>>, %arg6: memref<1x32xf32, #tpu.memory_space<vmem>>, %arg7: memref<32x32xbf16, #tpu.memory_space<vmem>>, %arg8: memref<1x32xf32, #tpu.memory_space<vmem>>, %arg9: memref<32x32xbf16, #tpu.memory_space<vmem>>, %arg10: memref<1x32xf32, #tpu.memory_space<vmem>>, %arg11: memref<32x32xbf16, #tpu.memory_space<vmem>>, %arg12: memref<1x32xf32, #tpu.memory_space<vmem>>, %arg13: memref<1x8x32xf32, #tpu.memory_space<vmem>>, %arg14: memref<1x4x8x128xf32, #tpu.memory_space<vmem>>, %arg15: memref<128x32xbf16, #tpu.memory_space<vmem>>, %arg16: memref<128x32xbf16, #tpu.memory_space<vmem>>, %arg17: memref<8x32xf32, #tpu.memory_space<vmem>>) attributes {dimension_semantics = [#tpu.dimension_semantics<parallel>, #tpu.dimension_semantics<arbitrary>], iteration_bounds = array<i64: 2, 1>, scalar_prefetch = 0 : i64, scratch_operands = 3 : i64, tpu.core_type = #tpu.core_type<tc>, window_params = [{transform_indices = @transform_0, window_bounds = array<i64: 1, 8, 32>}, {transform_indices = @transform_1, window_bounds = array<i64: 1, 128, 32>}, {transform_indices = @transform_2, window_bounds = array<i64: 1, 128, 32>}, {pipeline_mode = #tpu.pipeline_mode<synchronous>, transform_indices = @transform_3, window_bounds = array<i64: 32, 32>}, {pipeline_mode = #tpu.pipeline_mode<synchronous>, transform_indices = @transform_4, window_bounds = array<i64: 1, 32>}, {pipeline_mode = #tpu.pipeline_mode<synchronous>, transform_indices = @transform_5, window_bounds = array<i64: 32, 32>}, {pipeline_mode = #tpu.pipeline_mode<synchronous>, transform_indices = @transform_6, window_bounds = array<i64: 1, 32>}, {pipeline_mode = #tpu.pipeline_mode<synchronous>, transform_indices = @transform_7, window_bounds = array<i64: 32, 32>}, {pipeline_mode = #tpu.pipeline_mode<synchronous>, transform_indices = @transform_8, window_bounds = array<i64: 1, 32>}, {pipeline_mode = #tpu.pipeline_mode<synchronous>, transform_indices = @transform_9, window_bounds = array<i64: 32, 32>}, {pipeline_mode = #tpu.pipeline_mode<synchronous>, transform_indices = @transform_10, window_bounds = array<i64: 1, 32>}, {transform_indices = @transform_11, window_bounds = array<i64: 1, 8, 32>}, {transform_indices = @transform_12, window_bounds = array<i64: 1, 4, 8, 128>}]} {
    %c0_i32 = arith.constant 0 : i32
    %0 = arith.cmpi eq, %arg1, %c0_i32 : i32
    %1 = arith.extui %0 : i1 to i32
    %c0_i32_0 = arith.constant 0 : i32
    %2 = arith.cmpi ne, %1, %c0_i32_0 : i32
    scf.if %2 {
      %c0_71 = arith.constant 0 : index
      %c0_72 = arith.constant 0 : index
      %c0_73 = arith.constant 0 : index
      %112 = vector.load %arg3[%c0_71, %c0_72, %c0_73] : memref<1x128x32xbf16, #tpu.memory_space<vmem>>, vector<1x128x32xbf16>
      %113 = vector.shape_cast %112 : vector<1x128x32xbf16> to vector<128x32xbf16>
      %c0_74 = arith.constant 0 : index
      %c0_75 = arith.constant 0 : index
      %c0_76 = arith.constant 0 : index
      %114 = vector.load %arg4[%c0_74, %c0_75, %c0_76] : memref<1x128x32xbf16, #tpu.memory_space<vmem>>, vector<1x128x32xbf16>
      %115 = vector.shape_cast %114 : vector<1x128x32xbf16> to vector<128x32xbf16>
      %c0_77 = arith.constant 0 : index
      %c0_78 = arith.constant 0 : index
      %116 = vector.load %arg7[%c0_77, %c0_78] : memref<32x32xbf16, #tpu.memory_space<vmem>>, vector<32x32xbf16>
      %cst_79 = arith.constant dense<0.000000e+00> : vector<128x32xf32>
      %117 = tpu.matmul %113, %116, %cst_79 {dimension_numbers = #tpu.dot_dimension_numbers<[1], [0], [0], [1], [0, 0, 1, 1], [], []>} : vector<128x32xbf16>, vector<32x32xbf16>, vector<128x32xf32> -> vector<128x32xf32>
      %c0_80 = arith.constant 0 : index
      %c0_81 = arith.constant 0 : index
      %118 = vector.load %arg8[%c0_80, %c0_81] : memref<1x32xf32, #tpu.memory_space<vmem>>, vector<1x32xf32>
      %119 = vector.broadcast %118 : vector<1x32xf32> to vector<128x32xf32>
      %120 = arith.addf %117, %119 : vector<128x32xf32>
      %c0_82 = arith.constant 0 : index
      %c0_83 = arith.constant 0 : index
      %121 = vector.load %arg9[%c0_82, %c0_83] : memref<32x32xbf16, #tpu.memory_space<vmem>>, vector<32x32xbf16>
      %cst_84 = arith.constant dense<0.000000e+00> : vector<128x32xf32>
      %122 = tpu.matmul %115, %121, %cst_84 {dimension_numbers = #tpu.dot_dimension_numbers<[1], [0], [0], [1], [0, 0, 1, 1], [], []>} : vector<128x32xbf16>, vector<32x32xbf16>, vector<128x32xf32> -> vector<128x32xf32>
      %c0_85 = arith.constant 0 : index
      %c0_86 = arith.constant 0 : index
      %123 = vector.load %arg10[%c0_85, %c0_86] : memref<1x32xf32, #tpu.memory_space<vmem>>, vector<1x32xf32>
      %124 = vector.broadcast %123 : vector<1x32xf32> to vector<128x32xf32>
      %125 = arith.addf %122, %124 : vector<128x32xf32>
      %126 = arith.truncf %120 : vector<128x32xf32> to vector<128x32xbf16>
      %c0_87 = arith.constant 0 : index
      %c0_88 = arith.constant 0 : index
      %127 = vector.load %arg15[%c0_87, %c0_88] : memref<128x32xbf16, #tpu.memory_space<vmem>>, vector<128x32xbf16>
      tpu.vector_store %arg15[%c0_87, %c0_88], %126 {strides = array<i32>} : memref<128x32xbf16, #tpu.memory_space<vmem>>, vector<128x32xbf16>,
      %128 = arith.truncf %125 : vector<128x32xf32> to vector<128x32xbf16>
      %c0_89 = arith.constant 0 : index
      %c0_90 = arith.constant 0 : index
      %129 = vector.load %arg16[%c0_89, %c0_90] : memref<128x32xbf16, #tpu.memory_space<vmem>>, vector<128x32xbf16>
      tpu.vector_store %arg16[%c0_89, %c0_90], %128 {strides = array<i32>} : memref<128x32xbf16, #tpu.memory_space<vmem>>, vector<128x32xbf16>,
    } else {
    }
    %c0 = arith.constant 0 : index
    %c0_1 = arith.constant 0 : index
    %c0_2 = arith.constant 0 : index
    %3 = vector.load %arg2[%c0, %c0_1, %c0_2] : memref<1x8x32xbf16, #tpu.memory_space<vmem>>, vector<1x8x32xbf16>
    %4 = vector.shape_cast %3 : vector<1x8x32xbf16> to vector<8x32xbf16>
    %c0_3 = arith.constant 0 : index
    %c0_4 = arith.constant 0 : index
    %5 = vector.load %arg5[%c0_3, %c0_4] : memref<32x32xbf16, #tpu.memory_space<vmem>>, vector<32x32xbf16>
    %cst = arith.constant dense<0.000000e+00> : vector<8x32xf32>
    %6 = tpu.matmul %4, %5, %cst {dimension_numbers = #tpu.dot_dimension_numbers<[1], [0], [0], [1], [0, 0, 1, 1], [], []>} : vector<8x32xbf16>, vector<32x32xbf16>, vector<8x32xf32> -> vector<8x32xf32>
    %c0_5 = arith.constant 0 : index
    %c0_6 = arith.constant 0 : index
    %7 = vector.load %arg6[%c0_5, %c0_6] : memref<1x32xf32, #tpu.memory_space<vmem>>, vector<1x32xf32>
    %8 = vector.broadcast %7 : vector<1x32xf32> to vector<8x32xf32>
    %9 = arith.addf %6, %8 : vector<8x32xf32>
    %10 = arith.truncf %9 : vector<8x32xf32> to vector<8x32xbf16>
    %11 = tpu.iota {dimensions = array<i32: 1>} : vector<8x128xi32>
    %c8_i32 = arith.constant 8 : i32
    %12 = vector.broadcast %c8_i32 : i32 to vector<8x128xi32>
    %13 = arith.cmpi slt, %11, %12 : vector<8x128xi32>
    %14 = vector.extract_strided_slice %10 {offsets = [0, 0], sizes = [8, 8], strides = [1, 1]} : vector<8x32xbf16> to vector<8x8xbf16>
    %c0_7 = arith.constant 0 : index
    %c0_8 = arith.constant 0 : index
    %15 = vector.load %arg15[%c0_7, %c0_8] : memref<128x32xbf16, #tpu.memory_space<vmem>>, vector<128x8xbf16>
    %c0_9 = arith.constant 0 : index
    %c0_10 = arith.constant 0 : index
    %16 = vector.load %arg16[%c0_9, %c0_10] : memref<128x32xbf16, #tpu.memory_space<vmem>>, vector<128x8xbf16>
    %cst_11 = arith.constant dense<0.000000e+00> : vector<8x128xf32>
    %17 = tpu.matmul %14, %15, %cst_11 {dimension_numbers = #tpu.dot_dimension_numbers<[1], [1], [0], [0], [0, 0, 1, 0], [], []>} : vector<8x8xbf16>, vector<128x8xbf16>, vector<8x128xf32> -> vector<8x128xf32>
    %cst_12 = arith.constant -1.000000e+30 : f32
    %18 = vector.broadcast %cst_12 : f32 to vector<8x128xf32>
    %19 = arith.select %13, %17, %18 : vector<8x128xi1>, vector<8x128xf32>
    %cst_13 = arith.constant dense<0xFF800000> : vector<8xf32>
    %20 = vector.multi_reduction <maximumf>, %19, %cst_13 [1] : vector<8x128xf32> to vector<8xf32>
    %21 = vector.shape_cast %20 : vector<8xf32> to vector<8x1xf32>
    %22 = vector.broadcast %21 : vector<8x1xf32> to vector<8x128xf32>
    %23 = arith.subf %19, %22 : vector<8x128xf32>
    %24 = math.exp %23 : vector<8x128xf32>
    %cst_14 = arith.constant dense<0.000000e+00> : vector<8xf32>
    %25 = vector.multi_reduction <add>, %24, %cst_14 [1] : vector<8x128xf32> to vector<8xf32>
    %26 = vector.shape_cast %25 : vector<8xf32> to vector<8x1xf32>
    %27 = tpu.reciprocal %26 {approx = true} : vector<8x1xf32> -> vector<8x1xf32>
    %28 = vector.broadcast %27 : vector<8x1xf32> to vector<8x128xf32>
    %29 = arith.mulf %24, %28 : vector<8x128xf32>
    %c0_15 = arith.constant 0 : index
    %c0_16 = arith.constant 0 : index
    %c0_17 = arith.constant 0 : index
    %c0_18 = arith.constant 0 : index
    %30 = vector.load %arg14[%c0_15, %c0_16, %c0_17, %c0_18] : memref<1x4x8x128xf32, #tpu.memory_space<vmem>>, vector<1x1x8x128xf32>
    %31 = vector.shape_cast %30 : vector<1x1x8x128xf32> to vector<8x128xf32>
    %32 = vector.shape_cast %29 : vector<8x128xf32> to vector<1x1x8x128xf32>
    tpu.vector_store %arg14[%c0_15, %c0_16, %c0_17, %c0_18], %32 {strides = array<i32>} : memref<1x4x8x128xf32, #tpu.memory_space<vmem>>, vector<1x1x8x128xf32>,
    %33 = arith.truncf %29 : vector<8x128xf32> to vector<8x128xbf16>
    %cst_19 = arith.constant dense<0.000000e+00> : vector<8x8xf32>
    %34 = tpu.matmul %33, %16, %cst_19 {dimension_numbers = #tpu.dot_dimension_numbers<[1], [0], [0], [1], [0, 0, 1, 1], [], []>} : vector<8x128xbf16>, vector<128x8xbf16>, vector<8x8xf32> -> vector<8x8xf32>
    %c0_20 = arith.constant 0 : index
    %c0_21 = arith.constant 0 : index
    %35 = vector.load %arg17[%c0_20, %c0_21] : memref<8x32xf32, #tpu.memory_space<vmem>>, vector<8x8xf32>
    tpu.vector_store %arg17[%c0_20, %c0_21], %34 {strides = array<i32>} : memref<8x32xf32, #tpu.memory_space<vmem>>, vector<8x8xf32>,
    %36 = vector.extract_strided_slice %10 {offsets = [0, 8], sizes = [8, 8], strides = [1, 1]} : vector<8x32xbf16> to vector<8x8xbf16>
    %c0_22 = arith.constant 0 : index
    %c8 = arith.constant 8 : index
    %37 = vector.load %arg15[%c0_22, %c8] : memref<128x32xbf16, #tpu.memory_space<vmem>>, vector<128x8xbf16>
    %c0_23 = arith.constant 0 : index
    %c8_24 = arith.constant 8 : index
    %38 = vector.load %arg16[%c0_23, %c8_24] : memref<128x32xbf16, #tpu.memory_space<vmem>>, vector<128x8xbf16>
    %cst_25 = arith.constant dense<0.000000e+00> : vector<8x128xf32>
    %39 = tpu.matmul %36, %37, %cst_25 {dimension_numbers = #tpu.dot_dimension_numbers<[1], [1], [0], [0], [0, 0, 1, 0], [], []>} : vector<8x8xbf16>, vector<128x8xbf16>, vector<8x128xf32> -> vector<8x128xf32>
    %cst_26 = arith.constant -1.000000e+30 : f32
    %40 = vector.broadcast %cst_26 : f32 to vector<8x128xf32>
    %41 = arith.select %13, %39, %40 : vector<8x128xi1>, vector<8x128xf32>
    %cst_27 = arith.constant dense<0xFF800000> : vector<8xf32>
    %42 = vector.multi_reduction <maximumf>, %41, %cst_27 [1] : vector<8x128xf32> to vector<8xf32>
    %43 = vector.shape_cast %42 : vector<8xf32> to vector<8x1xf32>
    %44 = vector.broadcast %43 : vector<8x1xf32> to vector<8x128xf32>
    %45 = arith.subf %41, %44 : vector<8x128xf32>
    %46 = math.exp %45 : vector<8x128xf32>
    %cst_28 = arith.constant dense<0.000000e+00> : vector<8xf32>
    %47 = vector.multi_reduction <add>, %46, %cst_28 [1] : vector<8x128xf32> to vector<8xf32>
    %48 = vector.shape_cast %47 : vector<8xf32> to vector<8x1xf32>
    %49 = tpu.reciprocal %48 {approx = true} : vector<8x1xf32> -> vector<8x1xf32>
    %50 = vector.broadcast %49 : vector<8x1xf32> to vector<8x128xf32>
    %51 = arith.mulf %46, %50 : vector<8x128xf32>
    %c0_29 = arith.constant 0 : index
    %c1 = arith.constant 1 : index
    %c0_30 = arith.constant 0 : index
    %c0_31 = arith.constant 0 : index
    %52 = vector.load %arg14[%c0_29, %c1, %c0_30, %c0_31] : memref<1x4x8x128xf32, #tpu.memory_space<vmem>>, vector<1x1x8x128xf32>
    %53 = vector.shape_cast %52 : vector<1x1x8x128xf32> to vector<8x128xf32>
    %54 = vector.shape_cast %51 : vector<8x128xf32> to vector<1x1x8x128xf32>
    tpu.vector_store %arg14[%c0_29, %c1, %c0_30, %c0_31], %54 {strides = array<i32>} : memref<1x4x8x128xf32, #tpu.memory_space<vmem>>, vector<1x1x8x128xf32>,
    %55 = arith.truncf %51 : vector<8x128xf32> to vector<8x128xbf16>
    %cst_32 = arith.constant dense<0.000000e+00> : vector<8x8xf32>
    %56 = tpu.matmul %55, %38, %cst_32 {dimension_numbers = #tpu.dot_dimension_numbers<[1], [0], [0], [1], [0, 0, 1, 1], [], []>} : vector<8x128xbf16>, vector<128x8xbf16>, vector<8x8xf32> -> vector<8x8xf32>
    %c0_33 = arith.constant 0 : index
    %c8_34 = arith.constant 8 : index
    %57 = vector.load %arg17[%c0_33, %c8_34] : memref<8x32xf32, #tpu.memory_space<vmem>>, vector<8x8xf32>
    tpu.vector_store %arg17[%c0_33, %c8_34], %56 {strides = array<i32>} : memref<8x32xf32, #tpu.memory_space<vmem>>, vector<8x8xf32>,
    %58 = vector.extract_strided_slice %10 {offsets = [0, 16], sizes = [8, 8], strides = [1, 1]} : vector<8x32xbf16> to vector<8x8xbf16>
    %c0_35 = arith.constant 0 : index
    %c16 = arith.constant 16 : index
    %59 = vector.load %arg15[%c0_35, %c16] : memref<128x32xbf16, #tpu.memory_space<vmem>>, vector<128x8xbf16>
    %c0_36 = arith.constant 0 : index
    %c16_37 = arith.constant 16 : index
    %60 = vector.load %arg16[%c0_36, %c16_37] : memref<128x32xbf16, #tpu.memory_space<vmem>>, vector<128x8xbf16>
    %cst_38 = arith.constant dense<0.000000e+00> : vector<8x128xf32>
    %61 = tpu.matmul %58, %59, %cst_38 {dimension_numbers = #tpu.dot_dimension_numbers<[1], [1], [0], [0], [0, 0, 1, 0], [], []>} : vector<8x8xbf16>, vector<128x8xbf16>, vector<8x128xf32> -> vector<8x128xf32>
    %cst_39 = arith.constant -1.000000e+30 : f32
    %62 = vector.broadcast %cst_39 : f32 to vector<8x128xf32>
    %63 = arith.select %13, %61, %62 : vector<8x128xi1>, vector<8x128xf32>
    %cst_40 = arith.constant dense<0xFF800000> : vector<8xf32>
    %64 = vector.multi_reduction <maximumf>, %63, %cst_40 [1] : vector<8x128xf32> to vector<8xf32>
    %65 = vector.shape_cast %64 : vector<8xf32> to vector<8x1xf32>
    %66 = vector.broadcast %65 : vector<8x1xf32> to vector<8x128xf32>
    %67 = arith.subf %63, %66 : vector<8x128xf32>
    %68 = math.exp %67 : vector<8x128xf32>
    %cst_41 = arith.constant dense<0.000000e+00> : vector<8xf32>
    %69 = vector.multi_reduction <add>, %68, %cst_41 [1] : vector<8x128xf32> to vector<8xf32>
    %70 = vector.shape_cast %69 : vector<8xf32> to vector<8x1xf32>
    %71 = tpu.reciprocal %70 {approx = true} : vector<8x1xf32> -> vector<8x1xf32>
    %72 = vector.broadcast %71 : vector<8x1xf32> to vector<8x128xf32>
    %73 = arith.mulf %68, %72 : vector<8x128xf32>
    %c0_42 = arith.constant 0 : index
    %c2 = arith.constant 2 : index
    %c0_43 = arith.constant 0 : index
    %c0_44 = arith.constant 0 : index
    %74 = vector.load %arg14[%c0_42, %c2, %c0_43, %c0_44] : memref<1x4x8x128xf32, #tpu.memory_space<vmem>>, vector<1x1x8x128xf32>
    %75 = vector.shape_cast %74 : vector<1x1x8x128xf32> to vector<8x128xf32>
    %76 = vector.shape_cast %73 : vector<8x128xf32> to vector<1x1x8x128xf32>
    tpu.vector_store %arg14[%c0_42, %c2, %c0_43, %c0_44], %76 {strides = array<i32>} : memref<1x4x8x128xf32, #tpu.memory_space<vmem>>, vector<1x1x8x128xf32>,
    %77 = arith.truncf %73 : vector<8x128xf32> to vector<8x128xbf16>
    %cst_45 = arith.constant dense<0.000000e+00> : vector<8x8xf32>
    %78 = tpu.matmul %77, %60, %cst_45 {dimension_numbers = #tpu.dot_dimension_numbers<[1], [0], [0], [1], [0, 0, 1, 1], [], []>} : vector<8x128xbf16>, vector<128x8xbf16>, vector<8x8xf32> -> vector<8x8xf32>
    %c0_46 = arith.constant 0 : index
    %c16_47 = arith.constant 16 : index
    %79 = vector.load %arg17[%c0_46, %c16_47] : memref<8x32xf32, #tpu.memory_space<vmem>>, vector<8x8xf32>
    tpu.vector_store %arg17[%c0_46, %c16_47], %78 {strides = array<i32>} : memref<8x32xf32, #tpu.memory_space<vmem>>, vector<8x8xf32>,
    %80 = vector.extract_strided_slice %10 {offsets = [0, 24], sizes = [8, 8], strides = [1, 1]} : vector<8x32xbf16> to vector<8x8xbf16>
    %c0_48 = arith.constant 0 : index
    %c24 = arith.constant 24 : index
    %81 = vector.load %arg15[%c0_48, %c24] : memref<128x32xbf16, #tpu.memory_space<vmem>>, vector<128x8xbf16>
    %c0_49 = arith.constant 0 : index
    %c24_50 = arith.constant 24 : index
    %82 = vector.load %arg16[%c0_49, %c24_50] : memref<128x32xbf16, #tpu.memory_space<vmem>>, vector<128x8xbf16>
    %cst_51 = arith.constant dense<0.000000e+00> : vector<8x128xf32>
    %83 = tpu.matmul %80, %81, %cst_51 {dimension_numbers = #tpu.dot_dimension_numbers<[1], [1], [0], [0], [0, 0, 1, 0], [], []>} : vector<8x8xbf16>, vector<128x8xbf16>, vector<8x128xf32> -> vector<8x128xf32>
    %cst_52 = arith.constant -1.000000e+30 : f32
    %84 = vector.broadcast %cst_52 : f32 to vector<8x128xf32>
    %85 = arith.select %13, %83, %84 : vector<8x128xi1>, vector<8x128xf32>
    %cst_53 = arith.constant dense<0xFF800000> : vector<8xf32>
    %86 = vector.multi_reduction <maximumf>, %85, %cst_53 [1] : vector<8x128xf32> to vector<8xf32>
    %87 = vector.shape_cast %86 : vector<8xf32> to vector<8x1xf32>
    %88 = vector.broadcast %87 : vector<8x1xf32> to vector<8x128xf32>
    %89 = arith.subf %85, %88 : vector<8x128xf32>
    %90 = math.exp %89 : vector<8x128xf32>
    %cst_54 = arith.constant dense<0.000000e+00> : vector<8xf32>
    %91 = vector.multi_reduction <add>, %90, %cst_54 [1] : vector<8x128xf32> to vector<8xf32>
    %92 = vector.shape_cast %91 : vector<8xf32> to vector<8x1xf32>
    %93 = tpu.reciprocal %92 {approx = true} : vector<8x1xf32> -> vector<8x1xf32>
    %94 = vector.broadcast %93 : vector<8x1xf32> to vector<8x128xf32>
    %95 = arith.mulf %90, %94 : vector<8x128xf32>
    %c0_55 = arith.constant 0 : index
    %c3 = arith.constant 3 : index
    %c0_56 = arith.constant 0 : index
    %c0_57 = arith.constant 0 : index
    %96 = vector.load %arg14[%c0_55, %c3, %c0_56, %c0_57] : memref<1x4x8x128xf32, #tpu.memory_space<vmem>>, vector<1x1x8x128xf32>
    %97 = vector.shape_cast %96 : vector<1x1x8x128xf32> to vector<8x128xf32>
    %98 = vector.shape_cast %95 : vector<8x128xf32> to vector<1x1x8x128xf32>
    tpu.vector_store %arg14[%c0_55, %c3, %c0_56, %c0_57], %98 {strides = array<i32>} : memref<1x4x8x128xf32, #tpu.memory_space<vmem>>, vector<1x1x8x128xf32>,
    %99 = arith.truncf %95 : vector<8x128xf32> to vector<8x128xbf16>
    %cst_58 = arith.constant dense<0.000000e+00> : vector<8x8xf32>
    %100 = tpu.matmul %99, %82, %cst_58 {dimension_numbers = #tpu.dot_dimension_numbers<[1], [0], [0], [1], [0, 0, 1, 1], [], []>} : vector<8x128xbf16>, vector<128x8xbf16>, vector<8x8xf32> -> vector<8x8xf32>
    %c0_59 = arith.constant 0 : index
    %c24_60 = arith.constant 24 : index
    %101 = vector.load %arg17[%c0_59, %c24_60] : memref<8x32xf32, #tpu.memory_space<vmem>>, vector<8x8xf32>
    tpu.vector_store %arg17[%c0_59, %c24_60], %100 {strides = array<i32>} : memref<8x32xf32, #tpu.memory_space<vmem>>, vector<8x8xf32>,
    %c0_61 = arith.constant 0 : index
    %c0_62 = arith.constant 0 : index
    %102 = vector.load %arg17[%c0_61, %c0_62] : memref<8x32xf32, #tpu.memory_space<vmem>>, vector<8x32xf32>
    %103 = arith.truncf %102 : vector<8x32xf32> to vector<8x32xbf16>
    %c0_63 = arith.constant 0 : index
    %c0_64 = arith.constant 0 : index
    %104 = vector.load %arg11[%c0_63, %c0_64] : memref<32x32xbf16, #tpu.memory_space<vmem>>, vector<32x32xbf16>
    %cst_65 = arith.constant dense<0.000000e+00> : vector<8x32xf32>
    %105 = tpu.matmul %103, %104, %cst_65 {dimension_numbers = #tpu.dot_dimension_numbers<[1], [0], [0], [1], [0, 0, 1, 1], [], []>} : vector<8x32xbf16>, vector<32x32xbf16>, vector<8x32xf32> -> vector<8x32xf32>
    %c0_66 = arith.constant 0 : index
    %c0_67 = arith.constant 0 : index
    %106 = vector.load %arg12[%c0_66, %c0_67] : memref<1x32xf32, #tpu.memory_space<vmem>>, vector<1x32xf32>
    %107 = vector.broadcast %106 : vector<1x32xf32> to vector<8x32xf32>
    %108 = arith.addf %105, %107 : vector<8x32xf32>
    %c0_68 = arith.constant 0 : index
    %c0_69 = arith.constant 0 : index
    %c0_70 = arith.constant 0 : index
    %109 = vector.load %arg13[%c0_68, %c0_69, %c0_70] : memref<1x8x32xf32, #tpu.memory_space<vmem>>, vector<1x8x32xf32>
    %110 = vector.shape_cast %109 : vector<1x8x32xf32> to vector<8x32xf32>
    %111 = vector.shape_cast %108 : vector<8x32xf32> to vector<1x8x32xf32>
    tpu.vector_store %arg13[%c0_68, %c0_69, %c0_70], %111 {strides = array<i32>} : memref<1x8x32xf32, #tpu.memory_space<vmem>>, vector<1x8x32xf32>,
    return
  }
  func.func @transform_0(%arg0: i32, %arg1: i32) -> (i32, i32, i32) {
    %c0_i32 = arith.constant 0 : i32
    %c0_i32_0 = arith.constant 0 : i32
    return %arg0, %arg1, %c0_i32 : i32, i32, i32
  }
  func.func @transform_1(%arg0: i32, %arg1: i32) -> (i32, i32, i32) {
    %c0_i32 = arith.constant 0 : i32
    %c0_i32_0 = arith.constant 0 : i32
    %c0_i32_1 = arith.constant 0 : i32
    return %arg0, %c0_i32, %c0_i32_0 : i32, i32, i32
  }
  func.func @transform_2(%arg0: i32, %arg1: i32) -> (i32, i32, i32) {
    %c0_i32 = arith.constant 0 : i32
    %c0_i32_0 = arith.constant 0 : i32
    %c0_i32_1 = arith.constant 0 : i32
    return %arg0, %c0_i32, %c0_i32_0 : i32, i32, i32
  }
  func.func @transform_3(%arg0: i32, %arg1: i32) -> (i32, i32) {
    %c0_i32 = arith.constant 0 : i32
    %c0_i32_0 = arith.constant 0 : i32
    %c0_i32_1 = arith.constant 0 : i32
    return %c0_i32, %c0_i32_0 : i32, i32
  }
  func.func @transform_4(%arg0: i32, %arg1: i32) -> (i32, i32) {
    %c0_i32 = arith.constant 0 : i32
    %c0_i32_0 = arith.constant 0 : i32
    %c0_i32_1 = arith.constant 0 : i32
    return %c0_i32, %c0_i32_0 : i32, i32
  }
  func.func @transform_5(%arg0: i32, %arg1: i32) -> (i32, i32) {
    %c0_i32 = arith.constant 0 : i32
    %c0_i32_0 = arith.constant 0 : i32
    %c0_i32_1 = arith.constant 0 : i32
    return %c0_i32, %c0_i32_0 : i32, i32
  }
  func.func @transform_6(%arg0: i32, %arg1: i32) -> (i32, i32) {
    %c0_i32 = arith.constant 0 : i32
    %c0_i32_0 = arith.constant 0 : i32
    %c0_i32_1 = arith.constant 0 : i32
    return %c0_i32, %c0_i32_0 : i32, i32
  }
  func.func @transform_7(%arg0: i32, %arg1: i32) -> (i32, i32) {
    %c0_i32 = arith.constant 0 : i32
    %c0_i32_0 = arith.constant 0 : i32
    %c0_i32_1 = arith.constant 0 : i32
    return %c0_i32, %c0_i32_0 : i32, i32
  }
  func.func @transform_8(%arg0: i32, %arg1: i32) -> (i32, i32) {
    %c0_i32 = arith.constant 0 : i32
    %c0_i32_0 = arith.constant 0 : i32
    %c0_i32_1 = arith.constant 0 : i32
    return %c0_i32, %c0_i32_0 : i32, i32
  }
  func.func @transform_9(%arg0: i32, %arg1: i32) -> (i32, i32) {
    %c0_i32 = arith.constant 0 : i32
    %c0_i32_0 = arith.constant 0 : i32
    %c0_i32_1 = arith.constant 0 : i32
    return %c0_i32, %c0_i32_0 : i32, i32
  }
  func.func @transform_10(%arg0: i32, %arg1: i32) -> (i32, i32) {
    %c0_i32 = arith.constant 0 : i32
    %c0_i32_0 = arith.constant 0 : i32
    %c0_i32_1 = arith.constant 0 : i32
    return %c0_i32, %c0_i32_0 : i32, i32
  }
  func.func @transform_11(%arg0: i32, %arg1: i32) -> (i32, i32, i32) {
    %c0_i32 = arith.constant 0 : i32
    %c0_i32_0 = arith.constant 0 : i32
    return %arg0, %arg1, %c0_i32 : i32, i32, i32
  }
  func.func @transform_12(%arg0: i32, %arg1: i32) -> (i32, i32, i32, i32) {
    %c0_i32 = arith.constant 0 : i32
    %c0_i32_0 = arith.constant 0 : i32
    %c0_i32_1 = arith.constant 0 : i32
    return %arg0, %c0_i32, %arg1, %c0_i32_0 : i32, i32, i32, i32
  }
}

</mosaic_0001>

<llo_original>
// kernel: temporal_attention_layer.1
$region0: #{temporal_attention_layer.1}
  #allocation0 [shape = 'u32[]', space=smem, size = 0x4, offset = 0x4, fixed_abs, tag = 'smem constant byte address 0x4 - core index']
  #allocation1 [shape = 'u32[144,128]{1,0:T(1,128)}', space=vmem, size = 0x12000, scoped, tag = 'internal scratch']
  #allocation2 [shape = 'bf16[128,32]{1,0:T(8,128)(2,1)}', space=vmem, size = 0x8000, scoped, tag = 'scratch operand']
  #allocation3 [shape = 'bf16[128,32]{1,0:T(8,128)(2,1)}', space=vmem, size = 0x8000, scoped, tag = 'scratch operand']
  #allocation4 [shape = 'f32[8,32]{1,0:T(8,128)}', space=vmem, size = 0x1000, scoped, tag = 'scratch operand']
  %s0 = inlined_call_operand.vmem [shape: bf16[2,8,32], index: 0, kind: input, shape index: {}]
  %s1 = inlined_call_operand.vmem [shape: bf16[2,128,32], index: 1, kind: input, shape index: {}]
  %s2 = inlined_call_operand.vmem [shape: bf16[2,128,32], index: 2, kind: input, shape index: {}]
  %s3 = inlined_call_operand.vmem [shape: bf16[32,32], index: 3, kind: input, shape index: {}]
  %s4 = inlined_call_operand.vmem [shape: f32[1,32], index: 4, kind: input, shape index: {}]
  %s5 = inlined_call_operand.vmem [shape: bf16[32,32], index: 5, kind: input, shape index: {}]
  %s6 = inlined_call_operand.vmem [shape: f32[1,32], index: 6, kind: input, shape index: {}]
  %s7 = inlined_call_operand.vmem [shape: bf16[32,32], index: 7, kind: input, shape index: {}]
  %s8 = inlined_call_operand.vmem [shape: f32[1,32], index: 8, kind: input, shape index: {}]
  %s9 = inlined_call_operand.vmem [shape: bf16[32,32], index: 9, kind: input, shape index: {}]
  %s10 = inlined_call_operand.vmem [shape: f32[1,32], index: 10, kind: input, shape index: {}]
  %s11 = inlined_call_operand.hbm [shape: f32[2,8,32], index: 11, kind: output, shape index: {0}]
  %s12 = inlined_call_operand.hbm [shape: f32[2,4,8,128], index: 12, kind: output, shape index: {1}]
  %13 = xla_tuple %s11, %s12
  %s14 = sld [smem:[#allocation0]]
  $region89: #{temporal_attention_layer.1} parent=0
    _
  %s16 = ssub.s32 1, %s14
  %s17 = scalar_select 0, %s16, %s14
  $region1: #{temporal_attention_layer.1} parent=0
    #allocation5 [shape = 'u8[8192]{0}', space=vmem, size = 0x2000, scoped, tag = 'output window, operand 0']
    #allocation6 [shape = 's32[2]{0}', space=sflag, size = 0x8, scoped, tag = 'scoped memory for temporal_attention_layer.1']
    #allocation7 [shape = 'u8[32768]{0}', space=vmem, size = 0x8000, scoped, tag = 'output window, operand 1']
    #allocation8 [shape = 's32[2]{0}', space=sflag, size = 0x8, scoped, tag = 'scoped memory for temporal_attention_layer.1']
    %18 = vsyncpa [#allocation6], 0
    %s19 = scalar_lea.sflag [#allocation6], 1
    %20 = vsyncpa %s19, 0
    %21 = vsyncpa [#allocation8], 0
    %s22 = scalar_lea.sflag [#allocation8], 1
    %23 = vsyncpa %s22, 0
    loop: start=0, step=1, limit=4
    $region2: #{temporal_attention_layer.1} parent=1 // loop_pre_header
      _
    $region3: #{temporal_attention_layer.1} parent=1 // loop_header
      %s25 = sphi 0, %s29
      %p26 = scmp.ge.s32.totalorder %s25, 4
      %s32 = sphi 0, %s44
      %s33 = sphi 0, %s40
      %s34 = sphi 0, %s32
      %s35 = sphi 0, %s33
      %s36 = sphi 0, %s34
      %s37 = sphi 0, %s35
      %s49 = sphi 0, %s51
      %s52 = sphi 0, %s49
      %s53 = sphi 0, %s52
      %s69 = sphi 0, %s53
      %s75 = sphi 0, %s77
      %s78 = sphi 0, %s75
      %s79 = sphi 0, %s78
      %s95 = sphi 0, %s79
      %s101 = sphi 0, %s103
      %s104 = sphi 0, %s101
      %s105 = sphi 0, %s104
      %s121 = sphi 0, %s105
      %s125 = sphi 0, %s125
      %s127 = sphi 0, %s125
      %s128 = sphi 0, %s127
      %s142 = sphi 0, %s128
      %s146 = sphi 0, %s146
      %s148 = sphi 0, %s146
      %s149 = sphi 0, %s148
      %s163 = sphi 0, %s149
      %s167 = sphi 0, %s167
      %s169 = sphi 0, %s167
      %s170 = sphi 0, %s169
      %s184 = sphi 0, %s170
      %s188 = sphi 0, %s188
      %s190 = sphi 0, %s188
      %s191 = sphi 0, %s190
      %s205 = sphi 0, %s191
      %s209 = sphi 0, %s209
      %s211 = sphi 0, %s209
      %s212 = sphi 0, %s211
      %s226 = sphi 0, %s212
      %s230 = sphi 0, %s230
      %s232 = sphi 0, %s230
      %s233 = sphi 0, %s232
      %s247 = sphi 0, %s233
      %s251 = sphi 0, %s251
      %s253 = sphi 0, %s251
      %s254 = sphi 0, %s253
      %s268 = sphi 0, %s254
      %s272 = sphi 0, %s272
      %s274 = sphi 0, %s272
      %s275 = sphi 0, %s274
      %s289 = sphi 0, %s275
      %s297 = sphi 0, %s299
      %s300 = sphi 0, %s297
      %s301 = sphi 0, %s300
      %s317 = sphi 0, %s301
      %s325 = sphi 0, %s327
      %s328 = sphi 0, %s325
      %s329 = sphi 0, %s328
      %s345 = sphi 0, %s329
    $region4: #{temporal_attention_layer.1} parent=1 // loop_header_branch
      %28 = sbr.rel (%p26) target = $region8
    $region5: #{temporal_attention_layer.1} parent=1 // loop_body
      %s30 = ssub.s32 %s25, 1
      %s31 = ssub.s32 %s25, 2
      %s38 = sadd.s32 1, %s33
      %p39 = scmp.ge.s32.totalorder %s38, 1
      %s40 = scalar_select %p39, 0, %s38
      %s41 = sadd.s32 1, %s32
      %s42 = scalar_select %p39, %s41, %s32
      %p43 = scmp.ge.s32.totalorder %s42, 2
      %s44 = scalar_select %p43, 0, %s42
      %s45 = ssub.s32 %s32, %s44
      %s46 = ssub.s32 %s33, %s40
      %s47 = sor.u32 %s45, %s46
      %p48 = scmp.eq.s32.totalorder %s47, 0
      %s50 = sadd.s32 %s49, 1
      %s51 = scalar_select %p48, %s49, %s50
      %p54 = pneg %p48
      %p55 = scmp.eq.s32.totalorder %s25, 1
      %p56 = por %p54, %p55
      %p57 = scmp.ne.s32.totalorder %s49, %s52
      %p58 = scmp.eq.s32.totalorder %s25, 0
      %p59 = por %p57, %p58
      %p60 = scmp.ne.s32.totalorder %s49, %s52
      %p61 = scmp.eq.s32.totalorder %s30, 1
      %p62 = por %p60, %p61
      %p63 = scmp.ne.s32.totalorder %s52, %s53
      %p64 = scmp.eq.s32.totalorder %s30, 0
      %p65 = por %p63, %p64
      %p66 = scmp.ne.s32.totalorder %s52, %s53
      %p67 = scmp.eq.s32.totalorder %s31, 1
      %p68 = por %p66, %p67
      %p70 = scmp.ne.s32.totalorder %s53, %s69
      %p71 = scmp.eq.s32.totalorder %s31, 0
      %p72 = por %p70, %p71
      %s73 = ssub.s32 %s32, %s44
      %p74 = scmp.eq.s32.totalorder %s73, 0
      %s76 = sadd.s32 %s75, 1
      %s77 = scalar_select %p74, %s75, %s76
      %p80 = pneg %p74
      %p81 = scmp.eq.s32.totalorder %s25, 1
      %p82 = por %p80, %p81
      %p83 = scmp.ne.s32.totalorder %s75, %s78
      %p84 = scmp.eq.s32.totalorder %s25, 0
      %p85 = por %p83, %p84
      %p86 = scmp.ne.s32.totalorder %s75, %s78
      %p87 = scmp.eq.s32.totalorder %s30, 1
      %p88 = por %p86, %p87
      %p89 = scmp.ne.s32.totalorder %s78, %s79
      %p90 = scmp.eq.s32.totalorder %s30, 0
      %p91 = por %p89, %p90
      %p92 = scmp.ne.s32.totalorder %s78, %s79
      %p93 = scmp.eq.s32.totalorder %s31, 1
      %p94 = por %p92, %p93
      %p96 = scmp.ne.s32.totalorder %s79, %s95
      %p97 = scmp.eq.s32.totalorder %s31, 0
      %p98 = por %p96, %p97
      %s99 = ssub.s32 %s32, %s44
      %p100 = scmp.eq.s32.totalorder %s99, 0
      %s102 = sadd.s32 %s101, 1
      %s103 = scalar_select %p100, %s101, %s102
      %p106 = pneg %p100
      %p107 = scmp.eq.s32.totalorder %s25, 1
      %p108 = por %p106, %p107
      %p109 = scmp.ne.s32.totalorder %s101, %s104
      %p110 = scmp.eq.s32.totalorder %s25, 0
      %p111 = por %p109, %p110
      %p112 = scmp.ne.s32.totalorder %s101, %s104
      %p113 = scmp.eq.s32.totalorder %s30, 1
      %p114 = por %p112, %p113
      %p115 = scmp.ne.s32.totalorder %s104, %s105
      %p116 = scmp.eq.s32.totalorder %s30, 0
      %p117 = por %p115, %p116
      %p118 = scmp.ne.s32.totalorder %s104, %s105
      %p119 = scmp.eq.s32.totalorder %s31, 1
      %p120 = por %p118, %p119
      %p122 = scmp.ne.s32.totalorder %s105, %s121
      %p123 = scmp.eq.s32.totalorder %s31, 0
      %p124 = por %p122, %p123
      %s126 = sadd.s32 %s125, 1
      %p129 = scmp.eq.s32.totalorder %s25, 1
      %p130 = scmp.ne.s32.totalorder %s125, %s127
      %p131 = scmp.eq.s32.totalorder %s25, 0
      %p132 = por %p130, %p131
      %p133 = scmp.ne.s32.totalorder %s125, %s127
      %p134 = scmp.eq.s32.totalorder %s30, 1
      %p135 = por %p133, %p134
      %p136 = scmp.ne.s32.totalorder %s127, %s128
      %p137 = scmp.eq.s32.totalorder %s30, 0
      %p138 = por %p136, %p137
      %p139 = scmp.ne.s32.totalorder %s127, %s128
      %p140 = scmp.eq.s32.totalorder %s31, 1
      %p141 = por %p139, %p140
      %p143 = scmp.ne.s32.totalorder %s128, %s142
      %p144 = scmp.eq.s32.totalorder %s31, 0
      %p145 = por %p143, %p144
      %s147 = sadd.s32 %s146, 1
      %p150 = scmp.eq.s32.totalorder %s25, 1
      %p151 = scmp.ne.s32.totalorder %s146, %s148
      %p152 = scmp.eq.s32.totalorder %s25, 0
      %p153 = por %p151, %p152
      %p154 = scmp.ne.s32.totalorder %s146, %s148
      %p155 = scmp.eq.s32.totalorder %s30, 1
      %p156 = por %p154, %p155
      %p157 = scmp.ne.s32.totalorder %s148, %s149
      %p158 = scmp.eq.s32.totalorder %s30, 0
      %p159 = por %p157, %p158
      %p160 = scmp.ne.s32.totalorder %s148, %s149
      %p161 = scmp.eq.s32.totalorder %s31, 1
      %p162 = por %p160, %p161
      %p164 = scmp.ne.s32.totalorder %s149, %s163
      %p165 = scmp.eq.s32.totalorder %s31, 0
      %p166 = por %p164, %p165
      %s168 = sadd.s32 %s167, 1
      %p171 = scmp.eq.s32.totalorder %s25, 1
      %p172 = scmp.ne.s32.totalorder %s167, %s169
      %p173 = scmp.eq.s32.totalorder %s25, 0
      %p174 = por %p172, %p173
      %p175 = scmp.ne.s32.totalorder %s167, %s169
      %p176 = scmp.eq.s32.totalorder %s30, 1
      %p177 = por %p175, %p176
      %p178 = scmp.ne.s32.totalorder %s169, %s170
      %p179 = scmp.eq.s32.totalorder %s30, 0
      %p180 = por %p178, %p179
      %p181 = scmp.ne.s32.totalorder %s169, %s170
      %p182 = scmp.eq.s32.totalorder %s31, 1
      %p183 = por %p181, %p182
      %p185 = scmp.ne.s32.totalorder %s170, %s184
      %p186 = scmp.eq.s32.totalorder %s31, 0
      %p187 = por %p185, %p186
      %s189 = sadd.s32 %s188, 1
      %p192 = scmp.eq.s32.totalorder %s25, 1
      %p193 = scmp.ne.s32.totalorder %s188, %s190
      %p194 = scmp.eq.s32.totalorder %s25, 0
      %p195 = por %p193, %p194
      %p196 = scmp.ne.s32.totalorder %s188, %s190
      %p197 = scmp.eq.s32.totalorder %s30, 1
      %p198 = por %p196, %p197
      %p199 = scmp.ne.s32.totalorder %s190, %s191
      %p200 = scmp.eq.s32.totalorder %s30, 0
      %p201 = por %p199, %p200
      %p202 = scmp.ne.s32.totalorder %s190, %s191
      %p203 = scmp.eq.s32.totalorder %s31, 1
      %p204 = por %p202, %p203
      %p206 = scmp.ne.s32.totalorder %s191, %s205
      %p207 = scmp.eq.s32.totalorder %s31, 0
      %p208 = por %p206, %p207
      %s210 = sadd.s32 %s209, 1
      %p213 = scmp.eq.s32.totalorder %s25, 1
      %p214 = scmp.ne.s32.totalorder %s209, %s211
      %p215 = scmp.eq.s32.totalorder %s25, 0
      %p216 = por %p214, %p215
      %p217 = scmp.ne.s32.totalorder %s209, %s211
      %p218 = scmp.eq.s32.totalorder %s30, 1
      %p219 = por %p217, %p218
      %p220 = scmp.ne.s32.totalorder %s211, %s212
      %p221 = scmp.eq.s32.totalorder %s30, 0
      %p222 = por %p220, %p221
      %p223 = scmp.ne.s32.totalorder %s211, %s212
      %p224 = scmp.eq.s32.totalorder %s31, 1
      %p225 = por %p223, %p224
      %p227 = scmp.ne.s32.totalorder %s212, %s226
      %p228 = scmp.eq.s32.totalorder %s31, 0
      %p229 = por %p227, %p228
      %s231 = sadd.s32 %s230, 1
      %p234 = scmp.eq.s32.totalorder %s25, 1
      %p235 = scmp.ne.s32.totalorder %s230, %s232
      %p236 = scmp.eq.s32.totalorder %s25, 0
      %p237 = por %p235, %p236
      %p238 = scmp.ne.s32.totalorder %s230, %s232
      %p239 = scmp.eq.s32.totalorder %s30, 1
      %p240 = por %p238, %p239
      %p241 = scmp.ne.s32.totalorder %s232, %s233
      %p242 = scmp.eq.s32.totalorder %s30, 0
      %p243 = por %p241, %p242
      %p244 = scmp.ne.s32.totalorder %s232, %s233
      %p245 = scmp.eq.s32.totalorder %s31, 1
      %p246 = por %p244, %p245
      %p248 = scmp.ne.s32.totalorder %s233, %s247
      %p249 = scmp.eq.s32.totalorder %s31, 0
      %p250 = por %p248, %p249
      %s252 = sadd.s32 %s251, 1
      %p255 = scmp.eq.s32.totalorder %s25, 1
      %p256 = scmp.ne.s32.totalorder %s251, %s253
      %p257 = scmp.eq.s32.totalorder %s25, 0
      %p258 = por %p256, %p257
      %p259 = scmp.ne.s32.totalorder %s251, %s253
      %p260 = scmp.eq.s32.totalorder %s30, 1
      %p261 = por %p259, %p260
      %p262 = scmp.ne.s32.totalorder %s253, %s254
      %p263 = scmp.eq.s32.totalorder %s30, 0
      %p264 = por %p262, %p263
      %p265 = scmp.ne.s32.totalorder %s253, %s254
      %p266 = scmp.eq.s32.totalorder %s31, 1
      %p267 = por %p265, %p266
      %p269 = scmp.ne.s32.totalorder %s254, %s268
      %p270 = scmp.eq.s32.totalorder %s31, 0
      %p271 = por %p269, %p270
      %s273 = sadd.s32 %s272, 1
      %p276 = scmp.eq.s32.totalorder %s25, 1
      %p277 = scmp.ne.s32.totalorder %s272, %s274
      %p278 = scmp.eq.s32.totalorder %s25, 0
      %p279 = por %p277, %p278
      %p280 = scmp.ne.s32.totalorder %s272, %s274
      %p281 = scmp.eq.s32.totalorder %s30, 1
      %p282 = por %p280, %p281
      %p283 = scmp.ne.s32.totalorder %s274, %s275
      %p284 = scmp.eq.s32.totalorder %s30, 0
      %p285 = por %p283, %p284
      %p286 = scmp.ne.s32.totalorder %s274, %s275
      %p287 = scmp.eq.s32.totalorder %s31, 1
      %p288 = por %p286, %p287
      %p290 = scmp.ne.s32.totalorder %s275, %s289
      %p291 = scmp.eq.s32.totalorder %s31, 0
      %p292 = por %p290, %p291
      %s293 = ssub.s32 %s32, %s44
      %s294 = ssub.s32 %s33, %s40
      %s295 = sor.u32 %s293, %s294
      %p296 = scmp.eq.s32.totalorder %s295, 0
      %s298 = sadd.s32 %s297, 1
      %s299 = scalar_select %p296, %s297, %s298
      %p302 = pneg %p296
      %p303 = scmp.eq.s32.totalorder %s25, 1
      %p304 = por %p302, %p303
      %p305 = scmp.ne.s32.totalorder %s297, %s300
      %p306 = scmp.eq.s32.totalorder %s25, 0
      %p307 = por %p305, %p306
      %p308 = scmp.ne.s32.totalorder %s297, %s300
      %p309 = scmp.eq.s32.totalorder %s30, 1
      %p310 = por %p308, %p309
      %p311 = scmp.ne.s32.totalorder %s300, %s301
      %p312 = scmp.eq.s32.totalorder %s30, 0
      %p313 = por %p311, %p312
      %p314 = scmp.ne.s32.totalorder %s300, %s301
      %p315 = scmp.eq.s32.totalorder %s31, 1
      %p316 = por %p314, %p315
      %p318 = scmp.ne.s32.totalorder %s301, %s317
      %p319 = scmp.eq.s32.totalorder %s31, 0
      %p320 = por %p318, %p319
      %s321 = ssub.s32 %s32, %s44
      %s322 = ssub.s32 %s33, %s40
      %s323 = sor.u32 %s321, %s322
      %p324 = scmp.eq.s32.totalorder %s323, 0
      %s326 = sadd.s32 %s325, 1
      %s327 = scalar_select %p324, %s325, %s326
      %p330 = pneg %p324
      %p331 = scmp.eq.s32.totalorder %s25, 1
      %p332 = por %p330, %p331
      %p333 = scmp.ne.s32.totalorder %s325, %s328
      %p334 = scmp.eq.s32.totalorder %s25, 0
      %p335 = por %p333, %p334
      %p336 = scmp.ne.s32.totalorder %s325, %s328
      %p337 = scmp.eq.s32.totalorder %s30, 1
      %p338 = por %p336, %p337
      %p339 = scmp.ne.s32.totalorder %s328, %s329
      %p340 = scmp.eq.s32.totalorder %s30, 0
      %p341 = por %p339, %p340
      %p342 = scmp.ne.s32.totalorder %s328, %s329
      %p343 = scmp.eq.s32.totalorder %s31, 1
      %p344 = por %p342, %p343
      %p346 = scmp.ne.s32.totalorder %s329, %s345
      %p347 = scmp.eq.s32.totalorder %s31, 0
      %p348 = por %p346, %p347
      %p349 = scmp.le.s32.totalorder 1, %s25
      %p350 = scmp.lt.s32.totalorder %s25, 3
      %p351 = pnand %p349, %p350
      %p352 = pneg %p351
      // Predicated region
      $region9: #{temporal_attention_layer.1} parent=5 // pred_check
        _
      $region10: #{temporal_attention_layer.1} parent=5 // pred_check_branch
        %354 = sbr.rel (%p351) target = $region12
      $region11: #{temporal_attention_layer.1} parent=5 // pred_region
        %s355 = ssub.s32 %s25, 1
        // Predicated region
        $region13: #{temporal_attention_layer.1} parent=11 // pred_check
          %p356 = pneg %p138
        $region14: #{temporal_attention_layer.1} parent=11 // pred_check_branch
          %358 = sbr.rel (%p356) target = $region16
        $region15: #{temporal_attention_layer.1} parent=11 // pred_region
          _
        $region16: #{temporal_attention_layer.1} parent=11 // pred_fallthru
          _
        // Predicated region
        $region17: #{temporal_attention_layer.1} parent=11 // pred_check
          %p359 = pneg %p159
        $region18: #{temporal_attention_layer.1} parent=11 // pred_check_branch
          %361 = sbr.rel (%p359) target = $region20
        $region19: #{temporal_attention_layer.1} parent=11 // pred_region
          _
        $region20: #{temporal_attention_layer.1} parent=11 // pred_fallthru
          _
        // Predicated region
        $region21: #{temporal_attention_layer.1} parent=11 // pred_check
          %p362 = pneg %p180
        $region22: #{temporal_attention_layer.1} parent=11 // pred_check_branch
          %364 = sbr.rel (%p362) target = $region24
        $region23: #{temporal_attention_layer.1} parent=11 // pred_region
          _
        $region24: #{temporal_attention_layer.1} parent=11 // pred_fallthru
          _
        // Predicated region
        $region25: #{temporal_attention_layer.1} parent=11 // pred_check
          %p365 = pneg %p201
        $region26: #{temporal_attention_layer.1} parent=11 // pred_check_branch
          %367 = sbr.rel (%p365) target = $region28
        $region27: #{temporal_attention_layer.1} parent=11 // pred_region
          _
        $region28: #{temporal_attention_layer.1} parent=11 // pred_fallthru
          _
        // Predicated region
        $region29: #{temporal_attention_layer.1} parent=11 // pred_check
          %p368 = pneg %p222
        $region30: #{temporal_attention_layer.1} parent=11 // pred_check_branch
          %370 = sbr.rel (%p368) target = $region32
        $region31: #{temporal_attention_layer.1} parent=11 // pred_region
          _
        $region32: #{temporal_attention_layer.1} parent=11 // pred_fallthru
          _
        // Predicated region
        $region33: #{temporal_attention_layer.1} parent=11 // pred_check
          %p371 = pneg %p243
        $region34: #{temporal_attention_layer.1} parent=11 // pred_check_branch
          %373 = sbr.rel (%p371) target = $region36
        $region35: #{temporal_attention_layer.1} parent=11 // pred_region
          _
        $region36: #{temporal_attention_layer.1} parent=11 // pred_fallthru
          _
        // Predicated region
        $region37: #{temporal_attention_layer.1} parent=11 // pred_check
          %p374 = pneg %p264
        $region38: #{temporal_attention_layer.1} parent=11 // pred_check_branch
          %376 = sbr.rel (%p374) target = $region40
        $region39: #{temporal_attention_layer.1} parent=11 // pred_region
          _
        $region40: #{temporal_attention_layer.1} parent=11 // pred_fallthru
          _
        // Predicated region
        $region41: #{temporal_attention_layer.1} parent=11 // pred_check
          %p377 = pneg %p285
        $region42: #{temporal_attention_layer.1} parent=11 // pred_check_branch
          %379 = sbr.rel (%p377) target = $region44
        $region43: #{temporal_attention_layer.1} parent=11 // pred_region
          _
        $region44: #{temporal_attention_layer.1} parent=11 // pred_fallthru
          _
      $region12: #{temporal_attention_layer.1} parent=5 // pred_fallthru
        _
      %p380 = scmp.lt.s32.totalorder %s25, 2
      // Predicated region
      $region45: #{temporal_attention_layer.1} parent=5 // pred_check
        %p381 = pneg %p380
      $region46: #{temporal_attention_layer.1} parent=5 // pred_check_branch
        %383 = sbr.rel (%p381) target = $region48
      $region47: #{temporal_attention_layer.1} parent=5 // pred_region
        // Predicated region
        $region49: #{temporal_attention_layer.1} parent=47 // pred_check
          %p384 = pneg %p59
        $region50: #{temporal_attention_layer.1} parent=47 // pred_check_branch
          %386 = sbr.rel (%p384) target = $region52
        $region51: #{temporal_attention_layer.1} parent=47 // pred_region
          %p387 = scmp.lt.s32.totalorder %s32, 1
          %s388 = scalar_select %p387, %s32, 1
          %p389 = scmp.lt.s32.totalorder %s33, 0
          %s390 = scalar_select %p389, %s33, 0
          %s391 = sadd.s32 %s390, %s388
          %s392 = smul.addr %s391, 4
          %s393 = scalar_lea.vmem %s0, %s392
        $region52: #{temporal_attention_layer.1} parent=47 // pred_fallthru
          _
        // Predicated region
        $region53: #{temporal_attention_layer.1} parent=47 // pred_check
          %p394 = pneg %p85
        $region54: #{temporal_attention_layer.1} parent=47 // pred_check_branch
          %396 = sbr.rel (%p394) target = $region56
        $region55: #{temporal_attention_layer.1} parent=47 // pred_region
          %p397 = scmp.lt.s32.totalorder %s32, 1
          %s398 = scalar_select %p397, %s32, 1
          %s399 = smul.addr %s398, 16
          %s400 = smul.addr %s399, 4
          %s401 = scalar_lea.vmem %s1, %s400
        $region56: #{temporal_attention_layer.1} parent=47 // pred_fallthru
          _
        // Predicated region
        $region57: #{temporal_attention_layer.1} parent=47 // pred_check
          %p402 = pneg %p111
        $region58: #{temporal_attention_layer.1} parent=47 // pred_check_branch
          %404 = sbr.rel (%p402) target = $region60
        $region59: #{temporal_attention_layer.1} parent=47 // pred_region
          %p405 = scmp.lt.s32.totalorder %s32, 1
          %s406 = scalar_select %p405, %s32, 1
          %s407 = smul.addr %s406, 16
          %s408 = smul.addr %s407, 4
          %s409 = scalar_lea.vmem %s2, %s408
        $region60: #{temporal_attention_layer.1} parent=47 // pred_fallthru
          _
      $region48: #{temporal_attention_layer.1} parent=5 // pred_fallthru
        _
      %p410 = scmp.le.s32.totalorder 1, %s25
      %p411 = scmp.lt.s32.totalorder %s25, 3
      %p412 = pnand %p410, %p411
      %p413 = pneg %p412
      // Predicated region
      $region61: #{temporal_attention_layer.1} parent=5 // pred_check
        _
      $region62: #{temporal_attention_layer.1} parent=5 // pred_check_branch
        %415 = sbr.rel (%p412) target = $region64
      $region63: #{temporal_attention_layer.1} parent=5 // pred_region
        %s416 = ssub.s32 %s25, 1
        %p417 = scmp.lt.s32.totalorder %s34, 1
        %s418 = scalar_select %p417, %s34, 1
        %p419 = scmp.lt.s32.totalorder %s35, 0
        %s420 = scalar_select %p419, %s35, 0
        %s421 = sadd.s32 %s420, %s418
        %s422 = smul.addr %s421, 4
        %s423 = scalar_lea.vmem %s0, %s422
        %p424 = pneg %p65
        %p425 = pneg %p62
        %p426 = scmp.lt.s32.totalorder %s34, 1
        %s427 = scalar_select %p426, %s34, 1
        %s428 = smul.addr %s427, 16
        %s429 = smul.addr %s428, 4
        %s430 = scalar_lea.vmem %s1, %s429
        %p431 = pneg %p91
        %p432 = pneg %p88
        %p433 = scmp.lt.s32.totalorder %s34, 1
        %s434 = scalar_select %p433, %s34, 1
        %s435 = smul.addr %s434, 16
        %s436 = smul.addr %s435, 4
        %s437 = scalar_lea.vmem %s2, %s436
        %p438 = pneg %p117
        %p439 = pneg %p114
        %p440 = pneg %p138
        %p441 = pneg %p135
        %p442 = pneg %p159
        %p443 = pneg %p156
        %p444 = pneg %p180
        %p445 = pneg %p177
        %p446 = pneg %p201
        %p447 = pneg %p198
        %p448 = pneg %p222
        %p449 = pneg %p219
        %p450 = pneg %p243
        %p451 = pneg %p240
        %p452 = pneg %p264
        %p453 = pneg %p261
        %p454 = pneg %p285
        %p455 = pneg %p282
        %p456 = pneg %p313
        %p457 = pneg %p310
        %s458 = sand.u32 %s300, 1
        %s459 = scalar_lea.sflag [#allocation6], %s458
        %s460 = sand.u32 %s300, 1
        %s461 = smul.addr %s460, 8
        %s462 = scalar_lea.vmem [#allocation5], %s461
        %p463 = pneg %p341
        %p464 = pneg %p338
        %s465 = sand.u32 %s328, 1
        %s466 = scalar_lea.sflag [#allocation8], %s465
        %s467 = sand.u32 %s328, 1
        %s468 = smul.addr %s467, 32
        %s469 = scalar_lea.vmem [#allocation7], %s468
        %p470 = scmp.lt.s32.totalorder %s34, 1
        %s471 = scalar_select %p470, %s34, 1
        %p472 = scmp.lt.s32.totalorder %s35, 0
        %s473 = scalar_select %p472, %s35, 0
        %s474 = sadd.s32 %s473, %s471
        %s475 = smul.addr %s474, 4
        %s476 = scalar_lea.vmem %s0, %s475
        %p477 = scmp.lt.s32.totalorder %s34, 1
        %s478 = scalar_select %p477, %s34, 1
        %s479 = smul.addr %s478, 16
        %s480 = smul.addr %s479, 4
        %s481 = scalar_lea.vmem %s1, %s480
        %p482 = scmp.lt.s32.totalorder %s34, 1
        %s483 = scalar_select %p482, %s34, 1
        %s484 = smul.addr %s483, 16
        %s485 = smul.addr %s484, 4
        %s486 = scalar_lea.vmem %s2, %s485
        %p488 = scmp.eq.s32.totalorder %s35, 0
        // Predicated region
        $region65: #{temporal_attention_layer.1} parent=63 // pred_check
          %p489 = pneg %p488
        $region66: #{temporal_attention_layer.1} parent=63 // pred_check_branch
          %491 = sbr.rel (%p489) target = $region68
        $region67: #{temporal_attention_layer.1} parent=63 // pred_region
          %v492 = vld [vmem:[%s481] sm:$0xf]
          %v493 = vld [vmem:[%s481 + $0x4] sm:$0xf]
          %v494 = vld [vmem:[%s481 + $0x8] sm:$0xf]
          %v495 = vld [vmem:[%s481 + $0xc] sm:$0xf]
          %v496 = vld [vmem:[%s481 + $0x10] sm:$0xf]
          %v497 = vld [vmem:[%s481 + $0x14] sm:$0xf]
          %v498 = vld [vmem:[%s481 + $0x18] sm:$0xf]
          %v499 = vld [vmem:[%s481 + $0x1c] sm:$0xf]
          %v500 = vld [vmem:[%s481 + $0x20] sm:$0xf]
          %v501 = vld [vmem:[%s481 + $0x24] sm:$0xf]
          %v502 = vld [vmem:[%s481 + $0x28] sm:$0xf]
          %v503 = vld [vmem:[%s481 + $0x2c] sm:$0xf]
          %v504 = vld [vmem:[%s481 + $0x30] sm:$0xf]
          %v505 = vld [vmem:[%s481 + $0x34] sm:$0xf]
          %v506 = vld [vmem:[%s481 + $0x38] sm:$0xf]
          %v507 = vld [vmem:[%s481 + $0x3c] sm:$0xf]
          %v508 = vld [vmem:[%s486] sm:$0xf]
          %v509 = vld [vmem:[%s486 + $0x4] sm:$0xf]
          %v510 = vld [vmem:[%s486 + $0x8] sm:$0xf]
          %v511 = vld [vmem:[%s486 + $0xc] sm:$0xf]
          %v512 = vld [vmem:[%s486 + $0x10] sm:$0xf]
          %v513 = vld [vmem:[%s486 + $0x14] sm:$0xf]
          %v514 = vld [vmem:[%s486 + $0x18] sm:$0xf]
          %v515 = vld [vmem:[%s486 + $0x1c] sm:$0xf]
          %v516 = vld [vmem:[%s486 + $0x20] sm:$0xf]
          %v517 = vld [vmem:[%s486 + $0x24] sm:$0xf]
          %v518 = vld [vmem:[%s486 + $0x28] sm:$0xf]
          %v519 = vld [vmem:[%s486 + $0x2c] sm:$0xf]
          %v520 = vld [vmem:[%s486 + $0x30] sm:$0xf]
          %v521 = vld [vmem:[%s486 + $0x34] sm:$0xf]
          %v522 = vld [vmem:[%s486 + $0x38] sm:$0xf]
          %v523 = vld [vmem:[%s486 + $0x3c] sm:$0xf]
          %v524 = vld [vmem:[%s5] sm:$0xf]
          %v525 = vld [vmem:[%s5 + $0x4] sm:$0xf]
          %v526 = vld [vmem:[%s5 + $0x8] sm:$0xf]
          %v527 = vld [vmem:[%s5 + $0xc] sm:$0xf]
          %v528 = vld [vmem:[%s6] sm:$0x1]
          %v530 = vlaneseq
          %v531 = vshrl.u32 %v530, 7
          %v532 = vsub.s32 0, %v531
          %v533 = vrot.slane %v528, %v532
          %v551 = vunpack.c.l.b16 %v492
          %v552 = vunpack.c.l.b16 %v493
          %v553 = vunpack.c.l.b16 %v494
          %v554 = vunpack.c.l.b16 %v495
          %v555 = vunpack.c.l.b16 %v496
          %v556 = vunpack.c.l.b16 %v497
          %v557 = vunpack.c.l.b16 %v498
          %v558 = vunpack.c.l.b16 %v499
          %v559 = vunpack.c.l.b16 %v500
          %v560 = vunpack.c.l.b16 %v501
          %v561 = vunpack.c.l.b16 %v502
          %v562 = vunpack.c.l.b16 %v503
          %v563 = vunpack.c.l.b16 %v504
          %v564 = vunpack.c.l.b16 %v505
          %v565 = vunpack.c.l.b16 %v506
          %v566 = vunpack.c.l.b16 %v507
          %v567 = vpack.c.b16 %v552, %v551
          %v568 = vpack.c.b16 %v554, %v553
          %v569 = vpack.c.b16 %v556, %v555
          %v570 = vpack.c.b16 %v558, %v557
          %v571 = vpack.c.b16 %v560, %v559
          %v572 = vpack.c.b16 %v562, %v561
          %v573 = vpack.c.b16 %v564, %v563
          %v574 = vpack.c.b16 %v566, %v565
          %v579 = vunpack.c.l.b16 %v524
          %v580 = vunpack.c.l.b16 %v525
          %v581 = vunpack.c.l.b16 %v526
          %v582 = vunpack.c.l.b16 %v527
          %v583 = vpack.c.b16 %v580, %v579
          %v584 = vpack.c.b16 %v582, %v581
          %vm587 = vcmask 261120
          %v589 = vsel %vm587, %v567, 0
          %v592 = vsel %vm587, %v568, 0
          %v595 = vsel %vm587, %v569, 0
          %v598 = vsel %vm587, %v570, 0
          %v601 = vsel %vm587, %v571, 0
          %v604 = vsel %vm587, %v572, 0
          %v607 = vsel %vm587, %v573, 0
          %v610 = vsel %vm587, %v574, 0
          %612 = vmatprep.subr.bf16.mxu0 0
          %613 = vmatpush1.bf16.msra.mxu0 0
          %614 = vmatprep.subr.bf16.mxu0 0
          %615 = vmatpush1.bf16.msra.mxu0 0
          %616 = vmatprep.subr.bf16.mxu0 0
          %617 = vmatpush1.bf16.msra.mxu0 0
          %618 = vmatprep.subr.bf16.mxu0 0
          %619 = vmatpush1.bf16.msra.mxu0 0
          %620 = vmatprep.subr.bf16.mxu0 0
          %621 = vmatpush1.bf16.msra.mxu0 0
          %622 = vmatprep.subr.bf16.mxu0 0
          %623 = vmatpush1.bf16.msra.mxu0 0
          %624 = vmatprep.subr.bf16.mxu0 0
          %625 = vmatpush1.bf16.msra.mxu0 %v584
          %626 = vmatprep.subr.bf16.mxu0 0
          %627 = vmatpush1.bf16.msra.mxu0 %v583
          %628 = vmatprep.subr.bf16.mxu0 0
          %629 = vmatpush2.bf16.msra.mxu0 0
          %630 = vmatprep.subr.bf16.mxu0 0
          %631 = vmatpush2.bf16.msra.mxu0 0
          %632 = vmatprep.subr.bf16.mxu0 0
          %633 = vmatpush2.bf16.msra.mxu0 0
          %634 = vmatprep.subr.bf16.mxu0 0
          %635 = vmatpush2.bf16.msra.mxu0 0
          %636 = vmatprep.subr.bf16.mxu0 0
          %637 = vmatpush2.bf16.msra.mxu0 0
          %638 = vmatprep.subr.bf16.mxu0 0
          %639 = vmatpush2.bf16.msra.mxu0 0
          %640 = vmatprep.subr.bf16.mxu0 0
          %641 = vmatpush2.bf16.msra.mxu0 0
          %642 = vmatprep.subr.bf16.mxu0 0
          %643 = vmatpush2.bf16.msra.mxu0 0
          %644 = vmatprep.mubr.bf16.mxu0 0
          %645 = vmatmul.mubr.bf16.gmra.mxu0 %v589
          %v646 = vpop.f32.mrf.mxu0
          %v647 = vadd.f32 %v533, %v646
          %v648 = vpop.f32.mrf.mxu0
          %v649 = vpop.f32.mrf.mxu0
          %v650 = vadd.f32 %v533, %v649
          %v651 = vpop.f32.mrf.mxu0
          %652 = vmatprep.mubr.bf16.mxu0 0
          %653 = vmatmul.mubr.bf16.gmra.mxu0 %v592
          %v654 = vpop.f32.mrf.mxu0
          %v655 = vadd.f32 %v533, %v654
          %v656 = vpop.f32.mrf.mxu0
          %v657 = vpop.f32.mrf.mxu0
          %v658 = vadd.f32 %v533, %v657
          %v659 = vpop.f32.mrf.mxu0
          %660 = vmatprep.mubr.bf16.mxu0 0
          %661 = vmatmul.mubr.bf16.gmra.mxu0 %v595
          %v662 = vpop.f32.mrf.mxu0
          %v663 = vadd.f32 %v533, %v662
          %v664 = vpop.f32.mrf.mxu0
          %v665 = vpop.f32.mrf.mxu0
          %v666 = vadd.f32 %v533, %v665
          %v667 = vpop.f32.mrf.mxu0
          %668 = vmatprep.mubr.bf16.mxu0 0
          %669 = vmatmul.mubr.bf16.gmra.mxu0 %v598
          %v670 = vpop.f32.mrf.mxu0
          %v671 = vadd.f32 %v533, %v670
          %v672 = vpop.f32.mrf.mxu0
          %v673 = vpop.f32.mrf.mxu0
          %v674 = vadd.f32 %v533, %v673
          %v675 = vpop.f32.mrf.mxu0
          %676 = vmatprep.mubr.bf16.mxu0 0
          %677 = vmatmul.mubr.bf16.gmra.mxu0 %v601
          %v678 = vpop.f32.mrf.mxu0
          %v679 = vadd.f32 %v533, %v678
          %v680 = vpop.f32.mrf.mxu0
          %v681 = vpop.f32.mrf.mxu0
          %v682 = vadd.f32 %v533, %v681
          %v683 = vpop.f32.mrf.mxu0
          %684 = vmatprep.mubr.bf16.mxu0 0
          %685 = vmatmul.mubr.bf16.gmra.mxu0 %v604
          %v686 = vpop.f32.mrf.mxu0
          %v687 = vadd.f32 %v533, %v686
          %v688 = vpop.f32.mrf.mxu0
          %v689 = vpop.f32.mrf.mxu0
          %v690 = vadd.f32 %v533, %v689
          %v691 = vpop.f32.mrf.mxu0
          %692 = vmatprep.mubr.bf16.mxu0 0
          %693 = vmatmul.mubr.bf16.gmra.mxu0 %v607
          %v694 = vpop.f32.mrf.mxu0
          %v695 = vadd.f32 %v533, %v694
          %v696 = vpop.f32.mrf.mxu0
          %v697 = vpop.f32.mrf.mxu0
          %v698 = vadd.f32 %v533, %v697
          %v699 = vpop.f32.mrf.mxu0
          %700 = vmatprep.mubr.bf16.mxu0 0
          %701 = vmatmul.mubr.bf16.gmra.mxu0 %v610
          %v702 = vpop.f32.mrf.mxu0
          %v703 = vadd.f32 %v533, %v702
          %v704 = vpop.f32.mrf.mxu0
          %v705 = vpop.f32.mrf.mxu0
          %v706 = vadd.f32 %v533, %v705
          %v707 = vpop.f32.mrf.mxu0
          %708 = vdwg.mxu0
          %v709 = vld [vmem:[%s7] sm:$0xf]
          %v710 = vld [vmem:[%s7 + $0x4] sm:$0xf]
          %v711 = vld [vmem:[%s7 + $0x8] sm:$0xf]
          %v712 = vld [vmem:[%s7 + $0xc] sm:$0xf]
          %v713 = vld [vmem:[%s8] sm:$0x1]
          %v715 = vlaneseq
          %v716 = vshrl.u32 %v715, 7
          %v717 = vsub.s32 0, %v716
          %v718 = vrot.slane %v713, %v717
          %v736 = vunpack.c.l.b16 %v508
          %v737 = vunpack.c.l.b16 %v509
          %v738 = vunpack.c.l.b16 %v510
          %v739 = vunpack.c.l.b16 %v511
          %v740 = vunpack.c.l.b16 %v512
          %v741 = vunpack.c.l.b16 %v513
          %v742 = vunpack.c.l.b16 %v514
          %v743 = vunpack.c.l.b16 %v515
          %v744 = vunpack.c.l.b16 %v516
          %v745 = vunpack.c.l.b16 %v517
          %v746 = vunpack.c.l.b16 %v518
          %v747 = vunpack.c.l.b16 %v519
          %v748 = vunpack.c.l.b16 %v520
          %v749 = vunpack.c.l.b16 %v521
          %v750 = vunpack.c.l.b16 %v522
          %v751 = vunpack.c.l.b16 %v523
          %v752 = vpack.c.b16 %v737, %v736
          %v753 = vpack.c.b16 %v739, %v738
          %v754 = vpack.c.b16 %v741, %v740
          %v755 = vpack.c.b16 %v743, %v742
          %v756 = vpack.c.b16 %v745, %v744
          %v757 = vpack.c.b16 %v747, %v746
          %v758 = vpack.c.b16 %v749, %v748
          %v759 = vpack.c.b16 %v751, %v750
          %v764 = vunpack.c.l.b16 %v709
          %v765 = vunpack.c.l.b16 %v710
          %v766 = vunpack.c.l.b16 %v711
          %v767 = vunpack.c.l.b16 %v712
          %v768 = vpack.c.b16 %v765, %v764
          %v769 = vpack.c.b16 %v767, %v766
          %v773 = vsel %vm587, %v752, 0
          %v776 = vsel %vm587, %v753, 0
          %v779 = vsel %vm587, %v754, 0
          %v782 = vsel %vm587, %v755, 0
          %v785 = vsel %vm587, %v756, 0
          %v788 = vsel %vm587, %v757, 0
          %v791 = vsel %vm587, %v758, 0
          %v794 = vsel %vm587, %v759, 0
          %796 = vmatprep.subr.bf16.mxu0 0
          %797 = vmatpush1.bf16.msra.mxu0 0
          %798 = vmatprep.subr.bf16.mxu0 0
          %799 = vmatpush1.bf16.msra.mxu0 0
          %800 = vmatprep.subr.bf16.mxu0 0
          %801 = vmatpush1.bf16.msra.mxu0 0
          %802 = vmatprep.subr.bf16.mxu0 0
          %803 = vmatpush1.bf16.msra.mxu0 0
          %804 = vmatprep.subr.bf16.mxu0 0
          %805 = vmatpush1.bf16.msra.mxu0 0
          %806 = vmatprep.subr.bf16.mxu0 0
          %807 = vmatpush1.bf16.msra.mxu0 0
          %808 = vmatprep.subr.bf16.mxu0 0
          %809 = vmatpush1.bf16.msra.mxu0 %v769
          %810 = vmatprep.subr.bf16.mxu0 0
          %811 = vmatpush1.bf16.msra.mxu0 %v768
          %812 = vmatprep.subr.bf16.mxu0 0
          %813 = vmatpush2.bf16.msra.mxu0 0
          %814 = vmatprep.subr.bf16.mxu0 0
          %815 = vmatpush2.bf16.msra.mxu0 0
          %816 = vmatprep.subr.bf16.mxu0 0
          %817 = vmatpush2.bf16.msra.mxu0 0
          %818 = vmatprep.subr.bf16.mxu0 0
          %819 = vmatpush2.bf16.msra.mxu0 0
          %820 = vmatprep.subr.bf16.mxu0 0
          %821 = vmatpush2.bf16.msra.mxu0 0
          %822 = vmatprep.subr.bf16.mxu0 0
          %823 = vmatpush2.bf16.msra.mxu0 0
          %824 = vmatprep.subr.bf16.mxu0 0
          %825 = vmatpush2.bf16.msra.mxu0 0
          %826 = vmatprep.subr.bf16.mxu0 0
          %827 = vmatpush2.bf16.msra.mxu0 0
          %828 = vmatprep.mubr.bf16.mxu0 0
          %829 = vmatmul.mubr.bf16.gmra.mxu0 %v773
          %v830 = vpop.f32.mrf.mxu0
          %v831 = vadd.f32 %v718, %v830
          %v832 = vpop.f32.mrf.mxu0
          %v833 = vpop.f32.mrf.mxu0
          %v834 = vadd.f32 %v718, %v833
          %v835 = vpop.f32.mrf.mxu0
          %836 = vmatprep.mubr.bf16.mxu0 0
          %837 = vmatmul.mubr.bf16.gmra.mxu0 %v776
          %v838 = vpop.f32.mrf.mxu0
          %v839 = vadd.f32 %v718, %v838
          %v840 = vpop.f32.mrf.mxu0
          %v841 = vpop.f32.mrf.mxu0
          %v842 = vadd.f32 %v718, %v841
          %v843 = vpop.f32.mrf.mxu0
          %844 = vmatprep.mubr.bf16.mxu0 0
          %845 = vmatmul.mubr.bf16.gmra.mxu0 %v779
          %v846 = vpop.f32.mrf.mxu0
          %v847 = vadd.f32 %v718, %v846
          %v848 = vpop.f32.mrf.mxu0
          %v849 = vpop.f32.mrf.mxu0
          %v850 = vadd.f32 %v718, %v849
          %v851 = vpop.f32.mrf.mxu0
          %852 = vmatprep.mubr.bf16.mxu0 0
          %853 = vmatmul.mubr.bf16.gmra.mxu0 %v782
          %v854 = vpop.f32.mrf.mxu0
          %v855 = vadd.f32 %v718, %v854
          %v856 = vpop.f32.mrf.mxu0
          %v857 = vpop.f32.mrf.mxu0
          %v858 = vadd.f32 %v718, %v857
          %v859 = vpop.f32.mrf.mxu0
          %860 = vmatprep.mubr.bf16.mxu0 0
          %861 = vmatmul.mubr.bf16.gmra.mxu0 %v785
          %v862 = vpop.f32.mrf.mxu0
          %v863 = vadd.f32 %v718, %v862
          %v864 = vpop.f32.mrf.mxu0
          %v865 = vpop.f32.mrf.mxu0
          %v866 = vadd.f32 %v718, %v865
          %v867 = vpop.f32.mrf.mxu0
          %868 = vmatprep.mubr.bf16.mxu0 0
          %869 = vmatmul.mubr.bf16.gmra.mxu0 %v788
          %v870 = vpop.f32.mrf.mxu0
          %v871 = vadd.f32 %v718, %v870
          %v872 = vpop.f32.mrf.mxu0
          %v873 = vpop.f32.mrf.mxu0
          %v874 = vadd.f32 %v718, %v873
          %v875 = vpop.f32.mrf.mxu0
          %876 = vmatprep.mubr.bf16.mxu0 0
          %877 = vmatmul.mubr.bf16.gmra.mxu0 %v791
          %v878 = vpop.f32.mrf.mxu0
          %v879 = vadd.f32 %v718, %v878
          %v880 = vpop.f32.mrf.mxu0
          %v881 = vpop.f32.mrf.mxu0
          %v882 = vadd.f32 %v718, %v881
          %v883 = vpop.f32.mrf.mxu0
          %884 = vmatprep.mubr.bf16.mxu0 0
          %885 = vmatmul.mubr.bf16.gmra.mxu0 %v794
          %v886 = vpop.f32.mrf.mxu0
          %v887 = vadd.f32 %v718, %v886
          %v888 = vpop.f32.mrf.mxu0
          %v889 = vpop.f32.mrf.mxu0
          %v890 = vadd.f32 %v718, %v889
          %v891 = vpop.f32.mrf.mxu0
          %892 = vdwg.mxu0
          %v893 = vpack.c.bf16 %v650, %v647
          %v894 = vpack.c.bf16 %v658, %v655
          %v895 = vpack.c.bf16 %v666, %v663
          %v896 = vpack.c.bf16 %v674, %v671
          %v897 = vpack.c.bf16 %v682, %v679
          %v898 = vpack.c.bf16 %v690, %v687
          %v899 = vpack.c.bf16 %v698, %v695
          %v900 = vpack.c.bf16 %v706, %v703
          %v909 = vunpack.c.l.b16 %v893
          %v910 = vunpack.c.h.b16 %v893
          %v911 = vunpack.c.l.b16 %v894
          %v912 = vunpack.c.h.b16 %v894
          %v913 = vunpack.c.l.b16 %v895
          %v914 = vunpack.c.h.b16 %v895
          %v915 = vunpack.c.l.b16 %v896
          %v916 = vunpack.c.h.b16 %v896
          %v917 = vunpack.c.l.b16 %v897
          %v918 = vunpack.c.h.b16 %v897
          %v919 = vunpack.c.l.b16 %v898
          %v920 = vunpack.c.h.b16 %v898
          %v921 = vunpack.c.l.b16 %v899
          %v922 = vunpack.c.h.b16 %v899
          %v923 = vunpack.c.l.b16 %v900
          %v924 = vunpack.c.h.b16 %v900
          %v925 = vpack.c.b16 %v909, %v909
          %v926 = vpack.c.b16 %v910, %v910
          %v927 = vpack.c.b16 %v911, %v911
          %v928 = vpack.c.b16 %v912, %v912
          %v929 = vpack.c.b16 %v913, %v913
          %v930 = vpack.c.b16 %v914, %v914
          %v931 = vpack.c.b16 %v915, %v915
          %v932 = vpack.c.b16 %v916, %v916
          %v933 = vpack.c.b16 %v917, %v917
          %v934 = vpack.c.b16 %v918, %v918
          %v935 = vpack.c.b16 %v919, %v919
          %v936 = vpack.c.b16 %v920, %v920
          %v937 = vpack.c.b16 %v921, %v921
          %v938 = vpack.c.b16 %v922, %v922
          %v939 = vpack.c.b16 %v923, %v923
          %v940 = vpack.c.b16 %v924, %v924
          %vm957 = vcmask 257024
          %958 = vst.msk [vmem:[#allocation2] sm:$0xf] %vm957, %v925
          %959 = vst.msk [vmem:[#allocation2 + $0x4] sm:$0xf] %vm957, %v926
          %960 = vst.msk [vmem:[#allocation2 + $0x8] sm:$0xf] %vm957, %v927
          %961 = vst.msk [vmem:[#allocation2 + $0xc] sm:$0xf] %vm957, %v928
          %962 = vst.msk [vmem:[#allocation2 + $0x10] sm:$0xf] %vm957, %v929
          %963 = vst.msk [vmem:[#allocation2 + $0x14] sm:$0xf] %vm957, %v930
          %964 = vst.msk [vmem:[#allocation2 + $0x18] sm:$0xf] %vm957, %v931
          %965 = vst.msk [vmem:[#allocation2 + $0x1c] sm:$0xf] %vm957, %v932
          %966 = vst.msk [vmem:[#allocation2 + $0x20] sm:$0xf] %vm957, %v933
          %967 = vst.msk [vmem:[#allocation2 + $0x24] sm:$0xf] %vm957, %v934
          %968 = vst.msk [vmem:[#allocation2 + $0x28] sm:$0xf] %vm957, %v935
          %969 = vst.msk [vmem:[#allocation2 + $0x2c] sm:$0xf] %vm957, %v936
          %970 = vst.msk [vmem:[#allocation2 + $0x30] sm:$0xf] %vm957, %v937
          %971 = vst.msk [vmem:[#allocation2 + $0x34] sm:$0xf] %vm957, %v938
          %972 = vst.msk [vmem:[#allocation2 + $0x38] sm:$0xf] %vm957, %v939
          %973 = vst.msk [vmem:[#allocation2 + $0x3c] sm:$0xf] %vm957, %v940
          %v974 = vpack.c.bf16 %v834, %v831
          %v975 = vpack.c.bf16 %v842, %v839
          %v976 = vpack.c.bf16 %v850, %v847
          %v977 = vpack.c.bf16 %v858, %v855
          %v978 = vpack.c.bf16 %v866, %v863
          %v979 = vpack.c.bf16 %v874, %v871
          %v980 = vpack.c.bf16 %v882, %v879
          %v981 = vpack.c.bf16 %v890, %v887
          %v990 = vunpack.c.l.b16 %v974
          %v991 = vunpack.c.h.b16 %v974
          %v992 = vunpack.c.l.b16 %v975
          %v993 = vunpack.c.h.b16 %v975
          %v994 = vunpack.c.l.b16 %v976
          %v995 = vunpack.c.h.b16 %v976
          %v996 = vunpack.c.l.b16 %v977
          %v997 = vunpack.c.h.b16 %v977
          %v998 = vunpack.c.l.b16 %v978
          %v999 = vunpack.c.h.b16 %v978
          %v1000 = vunpack.c.l.b16 %v979
          %v1001 = vunpack.c.h.b16 %v979
          %v1002 = vunpack.c.l.b16 %v980
          %v1003 = vunpack.c.h.b16 %v980
          %v1004 = vunpack.c.l.b16 %v981
          %v1005 = vunpack.c.h.b16 %v981
          %v1006 = vpack.c.b16 %v990, %v990
          %v1007 = vpack.c.b16 %v991, %v991
          %v1008 = vpack.c.b16 %v992, %v992
          %v1009 = vpack.c.b16 %v993, %v993
          %v1010 = vpack.c.b16 %v994, %v994
          %v1011 = vpack.c.b16 %v995, %v995
          %v1012 = vpack.c.b16 %v996, %v996
          %v1013 = vpack.c.b16 %v997, %v997
          %v1014 = vpack.c.b16 %v998, %v998
          %v1015 = vpack.c.b16 %v999, %v999
          %v1016 = vpack.c.b16 %v1000, %v1000
          %v1017 = vpack.c.b16 %v1001, %v1001
          %v1018 = vpack.c.b16 %v1002, %v1002
          %v1019 = vpack.c.b16 %v1003, %v1003
          %v1020 = vpack.c.b16 %v1004, %v1004
          %v1021 = vpack.c.b16 %v1005, %v1005
          %1038 = vst.msk [vmem:[#allocation3] sm:$0xf] %vm957, %v1006
          %1039 = vst.msk [vmem:[#allocation3 + $0x4] sm:$0xf] %vm957, %v1007
          %1040 = vst.msk [vmem:[#allocation3 + $0x8] sm:$0xf] %vm957, %v1008
          %1041 = vst.msk [vmem:[#allocation3 + $0xc] sm:$0xf] %vm957, %v1009
          %1042 = vst.msk [vmem:[#allocation3 + $0x10] sm:$0xf] %vm957, %v1010
          %1043 = vst.msk [vmem:[#allocation3 + $0x14] sm:$0xf] %vm957, %v1011
          %1044 = vst.msk [vmem:[#allocation3 + $0x18] sm:$0xf] %vm957, %v1012
          %1045 = vst.msk [vmem:[#allocation3 + $0x1c] sm:$0xf] %vm957, %v1013
          %1046 = vst.msk [vmem:[#allocation3 + $0x20] sm:$0xf] %vm957, %v1014
          %1047 = vst.msk [vmem:[#allocation3 + $0x24] sm:$0xf] %vm957, %v1015
          %1048 = vst.msk [vmem:[#allocation3 + $0x28] sm:$0xf] %vm957, %v1016
          %1049 = vst.msk [vmem:[#allocation3 + $0x2c] sm:$0xf] %vm957, %v1017
          %1050 = vst.msk [vmem:[#allocation3 + $0x30] sm:$0xf] %vm957, %v1018
          %1051 = vst.msk [vmem:[#allocation3 + $0x34] sm:$0xf] %vm957, %v1019
          %1052 = vst.msk [vmem:[#allocation3 + $0x38] sm:$0xf] %vm957, %v1020
          %1053 = vst.msk [vmem:[#allocation3 + $0x3c] sm:$0xf] %vm957, %v1021
        $region68: #{temporal_attention_layer.1} parent=63 // pred_fallthru
          _
        %v1054 = vld [vmem:[%s476] sm:$0xf]
        %v1055 = vld [vmem:[%s3] sm:$0xf]
        %v1056 = vld [vmem:[%s3 + $0x4] sm:$0xf]
        %v1057 = vld [vmem:[%s3 + $0x8] sm:$0xf]
        %v1058 = vld [vmem:[%s3 + $0xc] sm:$0xf]
        %v1059 = vld [vmem:[%s4] sm:$0x1]
        %v1061 = vlaneseq
        %v1062 = vshrl.u32 %v1061, 7
        %v1063 = vsub.s32 0, %v1062
        %v1064 = vrot.slane %v1059, %v1063
        %v1070 = vunpack.c.l.b16 %v1055
        %v1071 = vunpack.c.l.b16 %v1056
        %v1072 = vunpack.c.l.b16 %v1057
        %v1073 = vunpack.c.l.b16 %v1058
        %v1074 = vpack.c.b16 %v1071, %v1070
        %v1075 = vpack.c.b16 %v1073, %v1072
        %vm1078 = vcmask 261120
        %v1080 = vsel %vm1078, %v1054, 0
        %1082 = vmatprep.subr.bf16.mxu0 0
        %1083 = vmatpush1.bf16.msra.mxu0 0
        %1084 = vmatprep.subr.bf16.mxu0 0
        %1085 = vmatpush1.bf16.msra.mxu0 0
        %1086 = vmatprep.subr.bf16.mxu0 0
        %1087 = vmatpush1.bf16.msra.mxu0 0
        %1088 = vmatprep.subr.bf16.mxu0 0
        %1089 = vmatpush1.bf16.msra.mxu0 0
        %1090 = vmatprep.subr.bf16.mxu0 0
        %1091 = vmatpush1.bf16.msra.mxu0 0
        %1092 = vmatprep.subr.bf16.mxu0 0
        %1093 = vmatpush1.bf16.msra.mxu0 0
        %1094 = vmatprep.subr.bf16.mxu0 0
        %1095 = vmatpush1.bf16.msra.mxu0 %v1075
        %1096 = vmatprep.subr.bf16.mxu0 0
        %1097 = vmatpush1.bf16.msra.mxu0 %v1074
        %1098 = vmatprep.subr.bf16.mxu0 0
        %1099 = vmatpush2.bf16.msra.mxu0 0
        %1100 = vmatprep.subr.bf16.mxu0 0
        %1101 = vmatpush2.bf16.msra.mxu0 0
        %1102 = vmatprep.subr.bf16.mxu0 0
        %1103 = vmatpush2.bf16.msra.mxu0 0
        %1104 = vmatprep.subr.bf16.mxu0 0
        %1105 = vmatpush2.bf16.msra.mxu0 0
        %1106 = vmatprep.subr.bf16.mxu0 0
        %1107 = vmatpush2.bf16.msra.mxu0 0
        %1108 = vmatprep.subr.bf16.mxu0 0
        %1109 = vmatpush2.bf16.msra.mxu0 0
        %1110 = vmatprep.subr.bf16.mxu0 0
        %1111 = vmatpush2.bf16.msra.mxu0 0
        %1112 = vmatprep.subr.bf16.mxu0 0
        %1113 = vmatpush2.bf16.msra.mxu0 0
        %1114 = vmatprep.mubr.bf16.mxu0 0
        %1115 = vmatmul.mubr.bf16.gmra.mxu0 %v1080
        %v1116 = vpop.f32.mrf.mxu0
        %v1117 = vadd.f32 %v1064, %v1116
        %v1118 = vpop.f32.mrf.mxu0
        %v1119 = vpop.f32.mrf.mxu0
        %v1120 = vpop.f32.mrf.mxu0
        %1121 = vdwg.mxu0
        %v1122 = vpack.c.bf16 %v1117, %v1117
        %v1123 = vlaneseq
        %v1124 = vand.u32 %v1123, 127
        %vm1125 = vcmp.lt.s32.totalorder %v1124, 8
        %v1126 = vld [vmem:[#allocation2] sm:$0xf]
        %v1127 = vld [vmem:[#allocation2 + $0x4] sm:$0xf]
        %v1128 = vld [vmem:[#allocation2 + $0x8] sm:$0xf]
        %v1129 = vld [vmem:[#allocation2 + $0xc] sm:$0xf]
        %v1130 = vld [vmem:[#allocation2 + $0x10] sm:$0xf]
        %v1131 = vld [vmem:[#allocation2 + $0x14] sm:$0xf]
        %v1132 = vld [vmem:[#allocation2 + $0x18] sm:$0xf]
        %v1133 = vld [vmem:[#allocation2 + $0x1c] sm:$0xf]
        %v1134 = vld [vmem:[#allocation2 + $0x20] sm:$0xf]
        %v1135 = vld [vmem:[#allocation2 + $0x24] sm:$0xf]
        %v1136 = vld [vmem:[#allocation2 + $0x28] sm:$0xf]
        %v1137 = vld [vmem:[#allocation2 + $0x2c] sm:$0xf]
        %v1138 = vld [vmem:[#allocation2 + $0x30] sm:$0xf]
        %v1139 = vld [vmem:[#allocation2 + $0x34] sm:$0xf]
        %v1140 = vld [vmem:[#allocation2 + $0x38] sm:$0xf]
        %v1141 = vld [vmem:[#allocation2 + $0x3c] sm:$0xf]
        %v1142 = vld [vmem:[#allocation3] sm:$0xf]
        %v1143 = vld [vmem:[#allocation3 + $0x4] sm:$0xf]
        %v1144 = vld [vmem:[#allocation3 + $0x8] sm:$0xf]
        %v1145 = vld [vmem:[#allocation3 + $0xc] sm:$0xf]
        %v1146 = vld [vmem:[#allocation3 + $0x10] sm:$0xf]
        %v1147 = vld [vmem:[#allocation3 + $0x14] sm:$0xf]
        %v1148 = vld [vmem:[#allocation3 + $0x18] sm:$0xf]
        %v1149 = vld [vmem:[#allocation3 + $0x1c] sm:$0xf]
        %v1150 = vld [vmem:[#allocation3 + $0x20] sm:$0xf]
        %v1151 = vld [vmem:[#allocation3 + $0x24] sm:$0xf]
        %v1152 = vld [vmem:[#allocation3 + $0x28] sm:$0xf]
        %v1153 = vld [vmem:[#allocation3 + $0x2c] sm:$0xf]
        %v1154 = vld [vmem:[#allocation3 + $0x30] sm:$0xf]
        %v1155 = vld [vmem:[#allocation3 + $0x34] sm:$0xf]
        %v1156 = vld [vmem:[#allocation3 + $0x38] sm:$0xf]
        %v1157 = vld [vmem:[#allocation3 + $0x3c] sm:$0xf]
        %v1174 = vunpack.c.l.b16 %v1126
        %v1175 = vunpack.c.l.b16 %v1127
        %v1176 = vunpack.c.l.b16 %v1128
        %v1177 = vunpack.c.l.b16 %v1129
        %v1178 = vunpack.c.l.b16 %v1130
        %v1179 = vunpack.c.l.b16 %v1131
        %v1180 = vunpack.c.l.b16 %v1132
        %v1181 = vunpack.c.l.b16 %v1133
        %v1182 = vunpack.c.l.b16 %v1134
        %v1183 = vunpack.c.l.b16 %v1135
        %v1184 = vunpack.c.l.b16 %v1136
        %v1185 = vunpack.c.l.b16 %v1137
        %v1186 = vunpack.c.l.b16 %v1138
        %v1187 = vunpack.c.l.b16 %v1139
        %v1188 = vunpack.c.l.b16 %v1140
        %v1189 = vunpack.c.l.b16 %v1141
        %v1190 = vpack.c.b16 %v1175, %v1174
        %v1191 = vpack.c.b16 %v1177, %v1176
        %v1192 = vpack.c.b16 %v1179, %v1178
        %v1193 = vpack.c.b16 %v1181, %v1180
        %v1194 = vpack.c.b16 %v1183, %v1182
        %v1195 = vpack.c.b16 %v1185, %v1184
        %v1196 = vpack.c.b16 %v1187, %v1186
        %v1197 = vpack.c.b16 %v1189, %v1188
        %vm1198 = vcmask 64512
        %v1200 = vsel %vm1198, %v1122, 0
        %v1203 = vsel %vm1198, %v1190, 0
        %v1206 = vsel %vm1198, %v1191, 0
        %v1209 = vsel %vm1198, %v1192, 0
        %v1212 = vsel %vm1198, %v1193, 0
        %v1215 = vsel %vm1198, %v1194, 0
        %v1218 = vsel %vm1198, %v1195, 0
        %v1221 = vsel %vm1198, %v1196, 0
        %v1224 = vsel %vm1198, %v1197, 0
        %1226 = vmatprep.subr.bf16.mxu0 0
        %1227 = vmatpush1.bf16.xpose.msra.mxu0 %v1224
        %1228 = vmatprep.subr.bf16.mxu0 0
        %1229 = vmatpush1.bf16.xpose.msra.mxu0 %v1221
        %1230 = vmatprep.subr.bf16.mxu0 0
        %1231 = vmatpush1.bf16.xpose.msra.mxu0 %v1218
        %1232 = vmatprep.subr.bf16.mxu0 0
        %1233 = vmatpush1.bf16.xpose.msra.mxu0 %v1215
        %1234 = vmatprep.subr.bf16.mxu0 0
        %1235 = vmatpush1.bf16.xpose.msra.mxu0 %v1212
        %1236 = vmatprep.subr.bf16.mxu0 0
        %1237 = vmatpush1.bf16.xpose.msra.mxu0 %v1209
        %1238 = vmatprep.subr.bf16.mxu0 0
        %1239 = vmatpush1.bf16.xpose.msra.mxu0 %v1206
        %1240 = vmatprep.subr.bf16.mxu0 0
        %1241 = vmatpush1.bf16.xpose.msra.mxu0 %v1203
        %1242 = vmatprep.subr.bf16.mxu0 0
        %1243 = vmatpush2.bf16.xpose.msra.mxu0 0
        %1244 = vmatprep.subr.bf16.mxu0 0
        %1245 = vmatpush2.bf16.xpose.msra.mxu0 0
        %1246 = vmatprep.subr.bf16.mxu0 0
        %1247 = vmatpush2.bf16.xpose.msra.mxu0 0
        %1248 = vmatprep.subr.bf16.mxu0 0
        %1249 = vmatpush2.bf16.xpose.msra.mxu0 0
        %1250 = vmatprep.subr.bf16.mxu0 0
        %1251 = vmatpush2.bf16.xpose.msra.mxu0 0
        %1252 = vmatprep.subr.bf16.mxu0 0
        %1253 = vmatpush2.bf16.xpose.msra.mxu0 0
        %1254 = vmatprep.subr.bf16.mxu0 0
        %1255 = vmatpush2.bf16.xpose.msra.mxu0 0
        %1256 = vmatprep.subr.bf16.mxu0 0
        %1257 = vmatpush2.bf16.xpose.msra.mxu0 0
        %1258 = vmatprep.mubr.bf16.mxu0 0
        %1259 = vmatmul.mubr.bf16.gmra.mxu0 %v1200
        %v1260 = vpop.f32.mrf.mxu0
        %v1261 = vadd.f32 0.0, %v1260
        %v1262 = vpop.f32.mrf.mxu0
        %v1263 = vpop.f32.mrf.mxu0
        %v1264 = vpop.f32.mrf.mxu0
        %1265 = vdwg.mxu0
        %v1266 = vsel %vm1125, %v1261, -1e+30
        %1267 = vmax.xlane.f32.xlu0 %v1266
        %v1268 = vpop.xlane.xlu0 %1267
        %v1269 = vsub.f32 %v1266, %v1268
        %v1270 = vmul.f32 %v1269, 1.442695
        %v1271 = vpow.pop %v1270
        %1272 = vadd.xlane.f32.xlu0 %v1271
        %v1273 = vpop.xlane.xlu0 %1272
        %v1274 = vrcp.pop %v1273
        %v1275 = vmul.f32 %v1271, %v1274
        %1276 = vst [vmem:[%s469] sm:$0xff] %v1275
        %v1277 = vpack.c.bf16 %v1275, %v1275
        %v1294 = vunpack.c.l.b16 %v1142
        %v1295 = vunpack.c.l.b16 %v1143
        %v1296 = vunpack.c.l.b16 %v1144
        %v1297 = vunpack.c.l.b16 %v1145
        %v1298 = vunpack.c.l.b16 %v1146
        %v1299 = vunpack.c.l.b16 %v1147
        %v1300 = vunpack.c.l.b16 %v1148
        %v1301 = vunpack.c.l.b16 %v1149
        %v1302 = vunpack.c.l.b16 %v1150
        %v1303 = vunpack.c.l.b16 %v1151
        %v1304 = vunpack.c.l.b16 %v1152
        %v1305 = vunpack.c.l.b16 %v1153
        %v1306 = vunpack.c.l.b16 %v1154
        %v1307 = vunpack.c.l.b16 %v1155
        %v1308 = vunpack.c.l.b16 %v1156
        %v1309 = vunpack.c.l.b16 %v1157
        %v1310 = vpack.c.b16 %v1295, %v1294
        %v1311 = vpack.c.b16 %v1297, %v1296
        %v1312 = vpack.c.b16 %v1299, %v1298
        %v1313 = vpack.c.b16 %v1301, %v1300
        %v1314 = vpack.c.b16 %v1303, %v1302
        %v1315 = vpack.c.b16 %v1305, %v1304
        %v1316 = vpack.c.b16 %v1307, %v1306
        %v1317 = vpack.c.b16 %v1309, %v1308
        %1326 = vmatprep.subr.bf16.mxu0 0
        %1327 = vmatpush1.bf16.msra.mxu0 %v1317
        %1328 = vmatprep.subr.bf16.mxu0 0
        %1329 = vmatpush1.bf16.msra.mxu0 %v1316
        %1330 = vmatprep.subr.bf16.mxu0 0
        %1331 = vmatpush1.bf16.msra.mxu0 %v1315
        %1332 = vmatprep.subr.bf16.mxu0 0
        %1333 = vmatpush1.bf16.msra.mxu0 %v1314
        %1334 = vmatprep.subr.bf16.mxu0 0
        %1335 = vmatpush1.bf16.msra.mxu0 %v1313
        %1336 = vmatprep.subr.bf16.mxu0 0
        %1337 = vmatpush1.bf16.msra.mxu0 %v1312
        %1338 = vmatprep.subr.bf16.mxu0 0
        %1339 = vmatpush1.bf16.msra.mxu0 %v1311
        %1340 = vmatprep.subr.bf16.mxu0 0
        %1341 = vmatpush1.bf16.msra.mxu0 %v1310
        %1342 = vmatprep.subr.bf16.mxu0 0
        %1343 = vmatpush2.bf16.msra.mxu0 0
        %1344 = vmatprep.subr.bf16.mxu0 0
        %1345 = vmatpush2.bf16.msra.mxu0 0
        %1346 = vmatprep.subr.bf16.mxu0 0
        %1347 = vmatpush2.bf16.msra.mxu0 0
        %1348 = vmatprep.subr.bf16.mxu0 0
        %1349 = vmatpush2.bf16.msra.mxu0 0
        %1350 = vmatprep.subr.bf16.mxu0 0
        %1351 = vmatpush2.bf16.msra.mxu0 0
        %1352 = vmatprep.subr.bf16.mxu0 0
        %1353 = vmatpush2.bf16.msra.mxu0 0
        %1354 = vmatprep.subr.bf16.mxu0 0
        %1355 = vmatpush2.bf16.msra.mxu0 0
        %1356 = vmatprep.subr.bf16.mxu0 0
        %1357 = vmatpush2.bf16.msra.mxu0 0
        %1358 = vmatprep.mubr.bf16.mxu0 0
        %1359 = vmatmul.mubr.bf16.gmra.mxu0 %v1277
        %v1360 = vpop.f32.mrf.mxu0
        %v1361 = vadd.f32 0.0, %v1360
        %v1362 = vpop.f32.mrf.mxu0
        %v1363 = vpop.f32.mrf.mxu0
        %v1364 = vpop.f32.mrf.mxu0
        %1365 = vdwg.mxu0
        %1366 = vst.msk [vmem:[#allocation4] sm:$0xff] %vm1198, %v1361
        %v1367 = vld [vmem:[#allocation2] sm:$0xf]
        %v1368 = vld [vmem:[#allocation2 + $0x4] sm:$0xf]
        %v1369 = vld [vmem:[#allocation2 + $0x8] sm:$0xf]
        %v1370 = vld [vmem:[#allocation2 + $0xc] sm:$0xf]
        %v1371 = vld [vmem:[#allocation2 + $0x10] sm:$0xf]
        %v1372 = vld [vmem:[#allocation2 + $0x14] sm:$0xf]
        %v1373 = vld [vmem:[#allocation2 + $0x18] sm:$0xf]
        %v1374 = vld [vmem:[#allocation2 + $0x1c] sm:$0xf]
        %v1375 = vld [vmem:[#allocation2 + $0x20] sm:$0xf]
        %v1376 = vld [vmem:[#allocation2 + $0x24] sm:$0xf]
        %v1377 = vld [vmem:[#allocation2 + $0x28] sm:$0xf]
        %v1378 = vld [vmem:[#allocation2 + $0x2c] sm:$0xf]
        %v1379 = vld [vmem:[#allocation2 + $0x30] sm:$0xf]
        %v1380 = vld [vmem:[#allocation2 + $0x34] sm:$0xf]
        %v1381 = vld [vmem:[#allocation2 + $0x38] sm:$0xf]
        %v1382 = vld [vmem:[#allocation2 + $0x3c] sm:$0xf]
        %v1383 = vld [vmem:[#allocation3] sm:$0xf]
        %v1384 = vld [vmem:[#allocation3 + $0x4] sm:$0xf]
        %v1385 = vld [vmem:[#allocation3 + $0x8] sm:$0xf]
        %v1386 = vld [vmem:[#allocation3 + $0xc] sm:$0xf]
        %v1387 = vld [vmem:[#allocation3 + $0x10] sm:$0xf]
        %v1388 = vld [vmem:[#allocation3 + $0x14] sm:$0xf]
        %v1389 = vld [vmem:[#allocation3 + $0x18] sm:$0xf]
        %v1390 = vld [vmem:[#allocation3 + $0x1c] sm:$0xf]
        %v1391 = vld [vmem:[#allocation3 + $0x20] sm:$0xf]
        %v1392 = vld [vmem:[#allocation3 + $0x24] sm:$0xf]
        %v1393 = vld [vmem:[#allocation3 + $0x28] sm:$0xf]
        %v1394 = vld [vmem:[#allocation3 + $0x2c] sm:$0xf]
        %v1395 = vld [vmem:[#allocation3 + $0x30] sm:$0xf]
        %v1396 = vld [vmem:[#allocation3 + $0x34] sm:$0xf]
        %v1397 = vld [vmem:[#allocation3 + $0x38] sm:$0xf]
        %v1398 = vld [vmem:[#allocation3 + $0x3c] sm:$0xf]
        %1400 = vrot.lane.b32.xlu0 %v1122, 120
        %v1401 = vpop.permute.xlu0 %1400
        %v1418 = vunpack.c.l.b16 %v1367
        %v1419 = vunpack.c.l.b16 %v1368
        %v1420 = vunpack.c.l.b16 %v1369
        %v1421 = vunpack.c.l.b16 %v1370
        %v1422 = vunpack.c.l.b16 %v1371
        %v1423 = vunpack.c.l.b16 %v1372
        %v1424 = vunpack.c.l.b16 %v1373
        %v1425 = vunpack.c.l.b16 %v1374
        %v1426 = vunpack.c.l.b16 %v1375
        %v1427 = vunpack.c.l.b16 %v1376
        %v1428 = vunpack.c.l.b16 %v1377
        %v1429 = vunpack.c.l.b16 %v1378
        %v1430 = vunpack.c.l.b16 %v1379
        %v1431 = vunpack.c.l.b16 %v1380
        %v1432 = vunpack.c.l.b16 %v1381
        %v1433 = vunpack.c.l.b16 %v1382
        %v1434 = vpack.c.b16 %v1419, %v1418
        %v1435 = vpack.c.b16 %v1421, %v1420
        %v1436 = vpack.c.b16 %v1423, %v1422
        %v1437 = vpack.c.b16 %v1425, %v1424
        %v1438 = vpack.c.b16 %v1427, %v1426
        %v1439 = vpack.c.b16 %v1429, %v1428
        %v1440 = vpack.c.b16 %v1431, %v1430
        %v1441 = vpack.c.b16 %v1433, %v1432
        %1442 = vrot.lane.b32.xlu0 %v1434, 120
        %v1443 = vpop.permute.xlu0 %1442
        %1444 = vrot.lane.b32.xlu0 %v1435, 120
        %v1445 = vpop.permute.xlu0 %1444
        %1446 = vrot.lane.b32.xlu0 %v1436, 120
        %v1447 = vpop.permute.xlu0 %1446
        %1448 = vrot.lane.b32.xlu0 %v1437, 120
        %v1449 = vpop.permute.xlu0 %1448
        %1450 = vrot.lane.b32.xlu0 %v1438, 120
        %v1451 = vpop.permute.xlu0 %1450
        %1452 = vrot.lane.b32.xlu0 %v1439, 120
        %v1453 = vpop.permute.xlu0 %1452
        %1454 = vrot.lane.b32.xlu0 %v1440, 120
        %v1455 = vpop.permute.xlu0 %1454
        %1456 = vrot.lane.b32.xlu0 %v1441, 120
        %v1457 = vpop.permute.xlu0 %1456
        %v1459 = vsel %vm1198, %v1401, 0
        %v1462 = vsel %vm1198, %v1443, 0
        %v1465 = vsel %vm1198, %v1445, 0
        %v1468 = vsel %vm1198, %v1447, 0
        %v1471 = vsel %vm1198, %v1449, 0
        %v1474 = vsel %vm1198, %v1451, 0
        %v1477 = vsel %vm1198, %v1453, 0
        %v1480 = vsel %vm1198, %v1455, 0
        %v1483 = vsel %vm1198, %v1457, 0
        %1485 = vmatprep.subr.bf16.mxu0 0
        %1486 = vmatpush1.bf16.xpose.msra.mxu0 %v1483
        %1487 = vmatprep.subr.bf16.mxu0 0
        %1488 = vmatpush1.bf16.xpose.msra.mxu0 %v1480
        %1489 = vmatprep.subr.bf16.mxu0 0
        %1490 = vmatpush1.bf16.xpose.msra.mxu0 %v1477
        %1491 = vmatprep.subr.bf16.mxu0 0
        %1492 = vmatpush1.bf16.xpose.msra.mxu0 %v1474
        %1493 = vmatprep.subr.bf16.mxu0 0
        %1494 = vmatpush1.bf16.xpose.msra.mxu0 %v1471
        %1495 = vmatprep.subr.bf16.mxu0 0
        %1496 = vmatpush1.bf16.xpose.msra.mxu0 %v1468
        %1497 = vmatprep.subr.bf16.mxu0 0
        %1498 = vmatpush1.bf16.xpose.msra.mxu0 %v1465
        %1499 = vmatprep.subr.bf16.mxu0 0
        %1500 = vmatpush1.bf16.xpose.msra.mxu0 %v1462
        %1501 = vmatprep.subr.bf16.mxu0 0
        %1502 = vmatpush2.bf16.xpose.msra.mxu0 0
        %1503 = vmatprep.subr.bf16.mxu0 0
        %1504 = vmatpush2.bf16.xpose.msra.mxu0 0
        %1505 = vmatprep.subr.bf16.mxu0 0
        %1506 = vmatpush2.bf16.xpose.msra.mxu0 0
        %1507 = vmatprep.subr.bf16.mxu0 0
        %1508 = vmatpush2.bf16.xpose.msra.mxu0 0
        %1509 = vmatprep.subr.bf16.mxu0 0
        %1510 = vmatpush2.bf16.xpose.msra.mxu0 0
        %1511 = vmatprep.subr.bf16.mxu0 0
        %1512 = vmatpush2.bf16.xpose.msra.mxu0 0
        %1513 = vmatprep.subr.bf16.mxu0 0
        %1514 = vmatpush2.bf16.xpose.msra.mxu0 0
        %1515 = vmatprep.subr.bf16.mxu0 0
        %1516 = vmatpush2.bf16.xpose.msra.mxu0 0
        %1517 = vmatprep.mubr.bf16.mxu0 0
        %1518 = vmatmul.mubr.bf16.gmra.mxu0 %v1459
        %v1519 = vpop.f32.mrf.mxu0
        %v1520 = vadd.f32 0.0, %v1519
        %v1521 = vpop.f32.mrf.mxu0
        %v1522 = vpop.f32.mrf.mxu0
        %v1523 = vpop.f32.mrf.mxu0
        %1524 = vdwg.mxu0
        %v1525 = vsel %vm1125, %v1520, -1e+30
        %1526 = vmax.xlane.f32.xlu0 %v1525
        %v1527 = vpop.xlane.xlu0 %1526
        %v1528 = vsub.f32 %v1525, %v1527
        %v1529 = vmul.f32 %v1528, 1.442695
        %v1530 = vpow.pop %v1529
        %1531 = vadd.xlane.f32.xlu0 %v1530
        %v1532 = vpop.xlane.xlu0 %1531
        %v1533 = vrcp.pop %v1532
        %v1534 = vmul.f32 %v1530, %v1533
        %s1535 = scalar_lea.vmem %s469, 8 [#allocation7]
        %1536 = vst [vmem:[%s1535] sm:$0xff] %v1534
        %v1537 = vpack.c.bf16 %v1534, %v1534
        %v1554 = vunpack.c.l.b16 %v1383
        %v1555 = vunpack.c.l.b16 %v1384
        %v1556 = vunpack.c.l.b16 %v1385
        %v1557 = vunpack.c.l.b16 %v1386
        %v1558 = vunpack.c.l.b16 %v1387
        %v1559 = vunpack.c.l.b16 %v1388
        %v1560 = vunpack.c.l.b16 %v1389
        %v1561 = vunpack.c.l.b16 %v1390
        %v1562 = vunpack.c.l.b16 %v1391
        %v1563 = vunpack.c.l.b16 %v1392
        %v1564 = vunpack.c.l.b16 %v1393
        %v1565 = vunpack.c.l.b16 %v1394
        %v1566 = vunpack.c.l.b16 %v1395
        %v1567 = vunpack.c.l.b16 %v1396
        %v1568 = vunpack.c.l.b16 %v1397
        %v1569 = vunpack.c.l.b16 %v1398
        %v1570 = vpack.c.b16 %v1555, %v1554
        %v1571 = vpack.c.b16 %v1557, %v1556
        %v1572 = vpack.c.b16 %v1559, %v1558
        %v1573 = vpack.c.b16 %v1561, %v1560
        %v1574 = vpack.c.b16 %v1563, %v1562
        %v1575 = vpack.c.b16 %v1565, %v1564
        %v1576 = vpack.c.b16 %v1567, %v1566
        %v1577 = vpack.c.b16 %v1569, %v1568
        %1578 = vrot.lane.b32.xlu0 %v1570, 120
        %v1579 = vpop.permute.xlu0 %1578
        %1580 = vrot.lane.b32.xlu0 %v1571, 120
        %v1581 = vpop.permute.xlu0 %1580
        %1582 = vrot.lane.b32.xlu0 %v1572, 120
        %v1583 = vpop.permute.xlu0 %1582
        %1584 = vrot.lane.b32.xlu0 %v1573, 120
        %v1585 = vpop.permute.xlu0 %1584
        %1586 = vrot.lane.b32.xlu0 %v1574, 120
        %v1587 = vpop.permute.xlu0 %1586
        %1588 = vrot.lane.b32.xlu0 %v1575, 120
        %v1589 = vpop.permute.xlu0 %1588
        %1590 = vrot.lane.b32.xlu0 %v1576, 120
        %v1591 = vpop.permute.xlu0 %1590
        %1592 = vrot.lane.b32.xlu0 %v1577, 120
        %v1593 = vpop.permute.xlu0 %1592
        %1602 = vmatprep.subr.bf16.mxu0 0
        %1603 = vmatpush1.bf16.msra.mxu0 %v1593
        %1604 = vmatprep.subr.bf16.mxu0 0
        %1605 = vmatpush1.bf16.msra.mxu0 %v1591
        %1606 = vmatprep.subr.bf16.mxu0 0
        %1607 = vmatpush1.bf16.msra.mxu0 %v1589
        %1608 = vmatprep.subr.bf16.mxu0 0
        %1609 = vmatpush1.bf16.msra.mxu0 %v1587
        %1610 = vmatprep.subr.bf16.mxu0 0
        %1611 = vmatpush1.bf16.msra.mxu0 %v1585
        %1612 = vmatprep.subr.bf16.mxu0 0
        %1613 = vmatpush1.bf16.msra.mxu0 %v1583
        %1614 = vmatprep.subr.bf16.mxu0 0
        %1615 = vmatpush1.bf16.msra.mxu0 %v1581
        %1616 = vmatprep.subr.bf16.mxu0 0
        %1617 = vmatpush1.bf16.msra.mxu0 %v1579
        %1618 = vmatprep.subr.bf16.mxu0 0
        %1619 = vmatpush2.bf16.msra.mxu0 0
        %1620 = vmatprep.subr.bf16.mxu0 0
        %1621 = vmatpush2.bf16.msra.mxu0 0
        %1622 = vmatprep.subr.bf16.mxu0 0
        %1623 = vmatpush2.bf16.msra.mxu0 0
        %1624 = vmatprep.subr.bf16.mxu0 0
        %1625 = vmatpush2.bf16.msra.mxu0 0
        %1626 = vmatprep.subr.bf16.mxu0 0
        %1627 = vmatpush2.bf16.msra.mxu0 0
        %1628 = vmatprep.subr.bf16.mxu0 0
        %1629 = vmatpush2.bf16.msra.mxu0 0
        %1630 = vmatprep.subr.bf16.mxu0 0
        %1631 = vmatpush2.bf16.msra.mxu0 0
        %1632 = vmatprep.subr.bf16.mxu0 0
        %1633 = vmatpush2.bf16.msra.mxu0 0
        %1634 = vmatprep.mubr.bf16.mxu0 0
        %1635 = vmatmul.mubr.bf16.gmra.mxu0 %v1537
        %v1636 = vpop.f32.mrf.mxu0
        %v1637 = vadd.f32 0.0, %v1636
        %v1638 = vpop.f32.mrf.mxu0
        %v1639 = vpop.f32.mrf.mxu0
        %v1640 = vpop.f32.mrf.mxu0
        %1641 = vdwg.mxu0
        %1643 = vrot.lane.b32.xlu0 %v1637, 8
        %v1644 = vpop.permute.xlu0 %1643
        %vm1646 = vcmask 130112
        %1647 = vst.msk [vmem:[#allocation4] sm:$0xff] %vm1646, %v1644
        %v1648 = vld [vmem:[#allocation2] sm:$0xf]
        %v1649 = vld [vmem:[#allocation2 + $0x4] sm:$0xf]
        %v1650 = vld [vmem:[#allocation2 + $0x8] sm:$0xf]
        %v1651 = vld [vmem:[#allocation2 + $0xc] sm:$0xf]
        %v1652 = vld [vmem:[#allocation2 + $0x10] sm:$0xf]
        %v1653 = vld [vmem:[#allocation2 + $0x14] sm:$0xf]
        %v1654 = vld [vmem:[#allocation2 + $0x18] sm:$0xf]
        %v1655 = vld [vmem:[#allocation2 + $0x1c] sm:$0xf]
        %v1656 = vld [vmem:[#allocation2 + $0x20] sm:$0xf]
        %v1657 = vld [vmem:[#allocation2 + $0x24] sm:$0xf]
        %v1658 = vld [vmem:[#allocation2 + $0x28] sm:$0xf]
        %v1659 = vld [vmem:[#allocation2 + $0x2c] sm:$0xf]
        %v1660 = vld [vmem:[#allocation2 + $0x30] sm:$0xf]
        %v1661 = vld [vmem:[#allocation2 + $0x34] sm:$0xf]
        %v1662 = vld [vmem:[#allocation2 + $0x38] sm:$0xf]
        %v1663 = vld [vmem:[#allocation2 + $0x3c] sm:$0xf]
        %v1664 = vld [vmem:[#allocation3] sm:$0xf]
        %v1665 = vld [vmem:[#allocation3 + $0x4] sm:$0xf]
        %v1666 = vld [vmem:[#allocation3 + $0x8] sm:$0xf]
        %v1667 = vld [vmem:[#allocation3 + $0xc] sm:$0xf]
        %v1668 = vld [vmem:[#allocation3 + $0x10] sm:$0xf]
        %v1669 = vld [vmem:[#allocation3 + $0x14] sm:$0xf]
        %v1670 = vld [vmem:[#allocation3 + $0x18] sm:$0xf]
        %v1671 = vld [vmem:[#allocation3 + $0x1c] sm:$0xf]
        %v1672 = vld [vmem:[#allocation3 + $0x20] sm:$0xf]
        %v1673 = vld [vmem:[#allocation3 + $0x24] sm:$0xf]
        %v1674 = vld [vmem:[#allocation3 + $0x28] sm:$0xf]
        %v1675 = vld [vmem:[#allocation3 + $0x2c] sm:$0xf]
        %v1676 = vld [vmem:[#allocation3 + $0x30] sm:$0xf]
        %v1677 = vld [vmem:[#allocation3 + $0x34] sm:$0xf]
        %v1678 = vld [vmem:[#allocation3 + $0x38] sm:$0xf]
        %v1679 = vld [vmem:[#allocation3 + $0x3c] sm:$0xf]
        %1680 = vrot.lane.b32.xlu0 %v1122, 112
        %v1681 = vpop.permute.xlu0 %1680
        %v1698 = vunpack.c.l.b16 %v1648
        %v1699 = vunpack.c.l.b16 %v1649
        %v1700 = vunpack.c.l.b16 %v1650
        %v1701 = vunpack.c.l.b16 %v1651
        %v1702 = vunpack.c.l.b16 %v1652
        %v1703 = vunpack.c.l.b16 %v1653
        %v1704 = vunpack.c.l.b16 %v1654
        %v1705 = vunpack.c.l.b16 %v1655
        %v1706 = vunpack.c.l.b16 %v1656
        %v1707 = vunpack.c.l.b16 %v1657
        %v1708 = vunpack.c.l.b16 %v1658
        %v1709 = vunpack.c.l.b16 %v1659
        %v1710 = vunpack.c.l.b16 %v1660
        %v1711 = vunpack.c.l.b16 %v1661
        %v1712 = vunpack.c.l.b16 %v1662
        %v1713 = vunpack.c.l.b16 %v1663
        %v1714 = vpack.c.b16 %v1699, %v1698
        %v1715 = vpack.c.b16 %v1701, %v1700
        %v1716 = vpack.c.b16 %v1703, %v1702
        %v1717 = vpack.c.b16 %v1705, %v1704
        %v1718 = vpack.c.b16 %v1707, %v1706
        %v1719 = vpack.c.b16 %v1709, %v1708
        %v1720 = vpack.c.b16 %v1711, %v1710
        %v1721 = vpack.c.b16 %v1713, %v1712
        %1722 = vrot.lane.b32.xlu0 %v1714, 112
        %v1723 = vpop.permute.xlu0 %1722
        %1724 = vrot.lane.b32.xlu0 %v1715, 112
        %v1725 = vpop.permute.xlu0 %1724
        %1726 = vrot.lane.b32.xlu0 %v1716, 112
        %v1727 = vpop.permute.xlu0 %1726
        %1728 = vrot.lane.b32.xlu0 %v1717, 112
        %v1729 = vpop.permute.xlu0 %1728
        %1730 = vrot.lane.b32.xlu0 %v1718, 112
        %v1731 = vpop.permute.xlu0 %1730
        %1732 = vrot.lane.b32.xlu0 %v1719, 112
        %v1733 = vpop.permute.xlu0 %1732
        %1734 = vrot.lane.b32.xlu0 %v1720, 112
        %v1735 = vpop.permute.xlu0 %1734
        %1736 = vrot.lane.b32.xlu0 %v1721, 112
        %v1737 = vpop.permute.xlu0 %1736
        %v1739 = vsel %vm1198, %v1681, 0
        %v1742 = vsel %vm1198, %v1723, 0
        %v1745 = vsel %vm1198, %v1725, 0
        %v1748 = vsel %vm1198, %v1727, 0
        %v1751 = vsel %vm1198, %v1729, 0
        %v1754 = vsel %vm1198, %v1731, 0
        %v1757 = vsel %vm1198, %v1733, 0
        %v1760 = vsel %vm1198, %v1735, 0
        %v1763 = vsel %vm1198, %v1737, 0
        %1765 = vmatprep.subr.bf16.mxu0 0
        %1766 = vmatpush1.bf16.xpose.msra.mxu0 %v1763
        %1767 = vmatprep.subr.bf16.mxu0 0
        %1768 = vmatpush1.bf16.xpose.msra.mxu0 %v1760
        %1769 = vmatprep.subr.bf16.mxu0 0
        %1770 = vmatpush1.bf16.xpose.msra.mxu0 %v1757
        %1771 = vmatprep.subr.bf16.mxu0 0
        %1772 = vmatpush1.bf16.xpose.msra.mxu0 %v1754
        %1773 = vmatprep.subr.bf16.mxu0 0
        %1774 = vmatpush1.bf16.xpose.msra.mxu0 %v1751
        %1775 = vmatprep.subr.bf16.mxu0 0
        %1776 = vmatpush1.bf16.xpose.msra.mxu0 %v1748
        %1777 = vmatprep.subr.bf16.mxu0 0
        %1778 = vmatpush1.bf16.xpose.msra.mxu0 %v1745
        %1779 = vmatprep.subr.bf16.mxu0 0
        %1780 = vmatpush1.bf16.xpose.msra.mxu0 %v1742
        %1781 = vmatprep.subr.bf16.mxu0 0
        %1782 = vmatpush2.bf16.xpose.msra.mxu0 0
        %1783 = vmatprep.subr.bf16.mxu0 0
        %1784 = vmatpush2.bf16.xpose.msra.mxu0 0
        %1785 = vmatprep.subr.bf16.mxu0 0
        %1786 = vmatpush2.bf16.xpose.msra.mxu0 0
        %1787 = vmatprep.subr.bf16.mxu0 0
        %1788 = vmatpush2.bf16.xpose.msra.mxu0 0
        %1789 = vmatprep.subr.bf16.mxu0 0
        %1790 = vmatpush2.bf16.xpose.msra.mxu0 0
        %1791 = vmatprep.subr.bf16.mxu0 0
        %1792 = vmatpush2.bf16.xpose.msra.mxu0 0
        %1793 = vmatprep.subr.bf16.mxu0 0
        %1794 = vmatpush2.bf16.xpose.msra.mxu0 0
        %1795 = vmatprep.subr.bf16.mxu0 0
        %1796 = vmatpush2.bf16.xpose.msra.mxu0 0
        %1797 = vmatprep.mubr.bf16.mxu0 0
        %1798 = vmatmul.mubr.bf16.gmra.mxu0 %v1739
        %v1799 = vpop.f32.mrf.mxu0
        %v1800 = vadd.f32 0.0, %v1799
        %v1801 = vpop.f32.mrf.mxu0
        %v1802 = vpop.f32.mrf.mxu0
        %v1803 = vpop.f32.mrf.mxu0
        %1804 = vdwg.mxu0
        %v1805 = vsel %vm1125, %v1800, -1e+30
        %1806 = vmax.xlane.f32.xlu0 %v1805
        %v1807 = vpop.xlane.xlu0 %1806
        %v1808 = vsub.f32 %v1805, %v1807
        %v1809 = vmul.f32 %v1808, 1.442695
        %v1810 = vpow.pop %v1809
        %1811 = vadd.xlane.f32.xlu0 %v1810
        %v1812 = vpop.xlane.xlu0 %1811
        %v1813 = vrcp.pop %v1812
        %v1814 = vmul.f32 %v1810, %v1813
        %s1815 = scalar_lea.vmem %s469, 16 [#allocation7]
        %1816 = vst [vmem:[%s1815] sm:$0xff] %v1814
        %v1817 = vpack.c.bf16 %v1814, %v1814
        %v1834 = vunpack.c.l.b16 %v1664
        %v1835 = vunpack.c.l.b16 %v1665
        %v1836 = vunpack.c.l.b16 %v1666
        %v1837 = vunpack.c.l.b16 %v1667
        %v1838 = vunpack.c.l.b16 %v1668
        %v1839 = vunpack.c.l.b16 %v1669
        %v1840 = vunpack.c.l.b16 %v1670
        %v1841 = vunpack.c.l.b16 %v1671
        %v1842 = vunpack.c.l.b16 %v1672
        %v1843 = vunpack.c.l.b16 %v1673
        %v1844 = vunpack.c.l.b16 %v1674
        %v1845 = vunpack.c.l.b16 %v1675
        %v1846 = vunpack.c.l.b16 %v1676
        %v1847 = vunpack.c.l.b16 %v1677
        %v1848 = vunpack.c.l.b16 %v1678
        %v1849 = vunpack.c.l.b16 %v1679
        %v1850 = vpack.c.b16 %v1835, %v1834
        %v1851 = vpack.c.b16 %v1837, %v1836
        %v1852 = vpack.c.b16 %v1839, %v1838
        %v1853 = vpack.c.b16 %v1841, %v1840
        %v1854 = vpack.c.b16 %v1843, %v1842
        %v1855 = vpack.c.b16 %v1845, %v1844
        %v1856 = vpack.c.b16 %v1847, %v1846
        %v1857 = vpack.c.b16 %v1849, %v1848
        %1858 = vrot.lane.b32.xlu0 %v1850, 112
        %v1859 = vpop.permute.xlu0 %1858
        %1860 = vrot.lane.b32.xlu0 %v1851, 112
        %v1861 = vpop.permute.xlu0 %1860
        %1862 = vrot.lane.b32.xlu0 %v1852, 112
        %v1863 = vpop.permute.xlu0 %1862
        %1864 = vrot.lane.b32.xlu0 %v1853, 112
        %v1865 = vpop.permute.xlu0 %1864
        %1866 = vrot.lane.b32.xlu0 %v1854, 112
        %v1867 = vpop.permute.xlu0 %1866
        %1868 = vrot.lane.b32.xlu0 %v1855, 112
        %v1869 = vpop.permute.xlu0 %1868
        %1870 = vrot.lane.b32.xlu0 %v1856, 112
        %v1871 = vpop.permute.xlu0 %1870
        %1872 = vrot.lane.b32.xlu0 %v1857, 112
        %v1873 = vpop.permute.xlu0 %1872
        %1882 = vmatprep.subr.bf16.mxu0 0
        %1883 = vmatpush1.bf16.msra.mxu0 %v1873
        %1884 = vmatprep.subr.bf16.mxu0 0
        %1885 = vmatpush1.bf16.msra.mxu0 %v1871
        %1886 = vmatprep.subr.bf16.mxu0 0
        %1887 = vmatpush1.bf16.msra.mxu0 %v1869
        %1888 = vmatprep.subr.bf16.mxu0 0
        %1889 = vmatpush1.bf16.msra.mxu0 %v1867
        %1890 = vmatprep.subr.bf16.mxu0 0
        %1891 = vmatpush1.bf16.msra.mxu0 %v1865
        %1892 = vmatprep.subr.bf16.mxu0 0
        %1893 = vmatpush1.bf16.msra.mxu0 %v1863
        %1894 = vmatprep.subr.bf16.mxu0 0
        %1895 = vmatpush1.bf16.msra.mxu0 %v1861
        %1896 = vmatprep.subr.bf16.mxu0 0
        %1897 = vmatpush1.bf16.msra.mxu0 %v1859
        %1898 = vmatprep.subr.bf16.mxu0 0
        %1899 = vmatpush2.bf16.msra.mxu0 0
        %1900 = vmatprep.subr.bf16.mxu0 0
        %1901 = vmatpush2.bf16.msra.mxu0 0
        %1902 = vmatprep.subr.bf16.mxu0 0
        %1903 = vmatpush2.bf16.msra.mxu0 0
        %1904 = vmatprep.subr.bf16.mxu0 0
        %1905 = vmatpush2.bf16.msra.mxu0 0
        %1906 = vmatprep.subr.bf16.mxu0 0
        %1907 = vmatpush2.bf16.msra.mxu0 0
        %1908 = vmatprep.subr.bf16.mxu0 0
        %1909 = vmatpush2.bf16.msra.mxu0 0
        %1910 = vmatprep.subr.bf16.mxu0 0
        %1911 = vmatpush2.bf16.msra.mxu0 0
        %1912 = vmatprep.subr.bf16.mxu0 0
        %1913 = vmatpush2.bf16.msra.mxu0 0
        %1914 = vmatprep.mubr.bf16.mxu0 0
        %1915 = vmatmul.mubr.bf16.gmra.mxu0 %v1817
        %v1916 = vpop.f32.mrf.mxu0
        %v1917 = vadd.f32 0.0, %v1916
        %v1918 = vpop.f32.mrf.mxu0
        %v1919 = vpop.f32.mrf.mxu0
        %v1920 = vpop.f32.mrf.mxu0
        %1921 = vdwg.mxu0
        %1923 = vrot.lane.b32.xlu0 %v1917, 16
        %v1924 = vpop.permute.xlu0 %1923
        %vm1926 = vcmask 195712
        %1927 = vst.msk [vmem:[#allocation4] sm:$0xff] %vm1926, %v1924
        %v1928 = vld [vmem:[#allocation2] sm:$0xf]
        %v1929 = vld [vmem:[#allocation2 + $0x4] sm:$0xf]
        %v1930 = vld [vmem:[#allocation2 + $0x8] sm:$0xf]
        %v1931 = vld [vmem:[#allocation2 + $0xc] sm:$0xf]
        %v1932 = vld [vmem:[#allocation2 + $0x10] sm:$0xf]
        %v1933 = vld [vmem:[#allocation2 + $0x14] sm:$0xf]
        %v1934 = vld [vmem:[#allocation2 + $0x18] sm:$0xf]
        %v1935 = vld [vmem:[#allocation2 + $0x1c] sm:$0xf]
        %v1936 = vld [vmem:[#allocation2 + $0x20] sm:$0xf]
        %v1937 = vld [vmem:[#allocation2 + $0x24] sm:$0xf]
        %v1938 = vld [vmem:[#allocation2 + $0x28] sm:$0xf]
        %v1939 = vld [vmem:[#allocation2 + $0x2c] sm:$0xf]
        %v1940 = vld [vmem:[#allocation2 + $0x30] sm:$0xf]
        %v1941 = vld [vmem:[#allocation2 + $0x34] sm:$0xf]
        %v1942 = vld [vmem:[#allocation2 + $0x38] sm:$0xf]
        %v1943 = vld [vmem:[#allocation2 + $0x3c] sm:$0xf]
        %v1944 = vld [vmem:[#allocation3] sm:$0xf]
        %v1945 = vld [vmem:[#allocation3 + $0x4] sm:$0xf]
        %v1946 = vld [vmem:[#allocation3 + $0x8] sm:$0xf]
        %v1947 = vld [vmem:[#allocation3 + $0xc] sm:$0xf]
        %v1948 = vld [vmem:[#allocation3 + $0x10] sm:$0xf]
        %v1949 = vld [vmem:[#allocation3 + $0x14] sm:$0xf]
        %v1950 = vld [vmem:[#allocation3 + $0x18] sm:$0xf]
        %v1951 = vld [vmem:[#allocation3 + $0x1c] sm:$0xf]
        %v1952 = vld [vmem:[#allocation3 + $0x20] sm:$0xf]
        %v1953 = vld [vmem:[#allocation3 + $0x24] sm:$0xf]
        %v1954 = vld [vmem:[#allocation3 + $0x28] sm:$0xf]
        %v1955 = vld [vmem:[#allocation3 + $0x2c] sm:$0xf]
        %v1956 = vld [vmem:[#allocation3 + $0x30] sm:$0xf]
        %v1957 = vld [vmem:[#allocation3 + $0x34] sm:$0xf]
        %v1958 = vld [vmem:[#allocation3 + $0x38] sm:$0xf]
        %v1959 = vld [vmem:[#allocation3 + $0x3c] sm:$0xf]
        %1960 = vrot.lane.b32.xlu0 %v1122, 104
        %v1961 = vpop.permute.xlu0 %1960
        %v1978 = vunpack.c.l.b16 %v1928
        %v1979 = vunpack.c.l.b16 %v1929
        %v1980 = vunpack.c.l.b16 %v1930
        %v1981 = vunpack.c.l.b16 %v1931
        %v1982 = vunpack.c.l.b16 %v1932
        %v1983 = vunpack.c.l.b16 %v1933
        %v1984 = vunpack.c.l.b16 %v1934
        %v1985 = vunpack.c.l.b16 %v1935
        %v1986 = vunpack.c.l.b16 %v1936
        %v1987 = vunpack.c.l.b16 %v1937
        %v1988 = vunpack.c.l.b16 %v1938
        %v1989 = vunpack.c.l.b16 %v1939
        %v1990 = vunpack.c.l.b16 %v1940
        %v1991 = vunpack.c.l.b16 %v1941
        %v1992 = vunpack.c.l.b16 %v1942
        %v1993 = vunpack.c.l.b16 %v1943
        %v1994 = vpack.c.b16 %v1979, %v1978
        %v1995 = vpack.c.b16 %v1981, %v1980
        %v1996 = vpack.c.b16 %v1983, %v1982
        %v1997 = vpack.c.b16 %v1985, %v1984
        %v1998 = vpack.c.b16 %v1987, %v1986
        %v1999 = vpack.c.b16 %v1989, %v1988
        %v2000 = vpack.c.b16 %v1991, %v1990
        %v2001 = vpack.c.b16 %v1993, %v1992
        %2002 = vrot.lane.b32.xlu0 %v1994, 104
        %v2003 = vpop.permute.xlu0 %2002
        %2004 = vrot.lane.b32.xlu0 %v1995, 104
        %v2005 = vpop.permute.xlu0 %2004
        %2006 = vrot.lane.b32.xlu0 %v1996, 104
        %v2007 = vpop.permute.xlu0 %2006
        %2008 = vrot.lane.b32.xlu0 %v1997, 104
        %v2009 = vpop.permute.xlu0 %2008
        %2010 = vrot.lane.b32.xlu0 %v1998, 104
        %v2011 = vpop.permute.xlu0 %2010
        %2012 = vrot.lane.b32.xlu0 %v1999, 104
        %v2013 = vpop.permute.xlu0 %2012
        %2014 = vrot.lane.b32.xlu0 %v2000, 104
        %v2015 = vpop.permute.xlu0 %2014
        %2016 = vrot.lane.b32.xlu0 %v2001, 104
        %v2017 = vpop.permute.xlu0 %2016
        %v2019 = vsel %vm1198, %v1961, 0
        %v2022 = vsel %vm1198, %v2003, 0
        %v2025 = vsel %vm1198, %v2005, 0
        %v2028 = vsel %vm1198, %v2007, 0
        %v2031 = vsel %vm1198, %v2009, 0
        %v2034 = vsel %vm1198, %v2011, 0
        %v2037 = vsel %vm1198, %v2013, 0
        %v2040 = vsel %vm1198, %v2015, 0
        %v2043 = vsel %vm1198, %v2017, 0
        %2045 = vmatprep.subr.bf16.mxu0 0
        %2046 = vmatpush1.bf16.xpose.msra.mxu0 %v2043
        %2047 = vmatprep.subr.bf16.mxu0 0
        %2048 = vmatpush1.bf16.xpose.msra.mxu0 %v2040
        %2049 = vmatprep.subr.bf16.mxu0 0
        %2050 = vmatpush1.bf16.xpose.msra.mxu0 %v2037
        %2051 = vmatprep.subr.bf16.mxu0 0
        %2052 = vmatpush1.bf16.xpose.msra.mxu0 %v2034
        %2053 = vmatprep.subr.bf16.mxu0 0
        %2054 = vmatpush1.bf16.xpose.msra.mxu0 %v2031
        %2055 = vmatprep.subr.bf16.mxu0 0
        %2056 = vmatpush1.bf16.xpose.msra.mxu0 %v2028
        %2057 = vmatprep.subr.bf16.mxu0 0
        %2058 = vmatpush1.bf16.xpose.msra.mxu0 %v2025
        %2059 = vmatprep.subr.bf16.mxu0 0
        %2060 = vmatpush1.bf16.xpose.msra.mxu0 %v2022
        %2061 = vmatprep.subr.bf16.mxu0 0
        %2062 = vmatpush2.bf16.xpose.msra.mxu0 0
        %2063 = vmatprep.subr.bf16.mxu0 0
        %2064 = vmatpush2.bf16.xpose.msra.mxu0 0
        %2065 = vmatprep.subr.bf16.mxu0 0
        %2066 = vmatpush2.bf16.xpose.msra.mxu0 0
        %2067 = vmatprep.subr.bf16.mxu0 0
        %2068 = vmatpush2.bf16.xpose.msra.mxu0 0
        %2069 = vmatprep.subr.bf16.mxu0 0
        %2070 = vmatpush2.bf16.xpose.msra.mxu0 0
        %2071 = vmatprep.subr.bf16.mxu0 0
        %2072 = vmatpush2.bf16.xpose.msra.mxu0 0
        %2073 = vmatprep.subr.bf16.mxu0 0
        %2074 = vmatpush2.bf16.xpose.msra.mxu0 0
        %2075 = vmatprep.subr.bf16.mxu0 0
        %2076 = vmatpush2.bf16.xpose.msra.mxu0 0
        %2077 = vmatprep.mubr.bf16.mxu0 0
        %2078 = vmatmul.mubr.bf16.gmra.mxu0 %v2019
        %v2079 = vpop.f32.mrf.mxu0
        %v2080 = vadd.f32 0.0, %v2079
        %v2081 = vpop.f32.mrf.mxu0
        %v2082 = vpop.f32.mrf.mxu0
        %v2083 = vpop.f32.mrf.mxu0
        %2084 = vdwg.mxu0
        %v2085 = vsel %vm1125, %v2080, -1e+30
        %2086 = vmax.xlane.f32.xlu0 %v2085
        %v2087 = vpop.xlane.xlu0 %2086
        %v2088 = vsub.f32 %v2085, %v2087
        %v2089 = vmul.f32 %v2088, 1.442695
        %v2090 = vpow.pop %v2089
        %2091 = vadd.xlane.f32.xlu0 %v2090
        %v2092 = vpop.xlane.xlu0 %2091
        %v2093 = vrcp.pop %v2092
        %v2094 = vmul.f32 %v2090, %v2093
        %s2095 = scalar_lea.vmem %s469, 24 [#allocation7]
        %2096 = vst [vmem:[%s2095] sm:$0xff] %v2094
        %v2097 = vpack.c.bf16 %v2094, %v2094
        %v2114 = vunpack.c.l.b16 %v1944
        %v2115 = vunpack.c.l.b16 %v1945
        %v2116 = vunpack.c.l.b16 %v1946
        %v2117 = vunpack.c.l.b16 %v1947
        %v2118 = vunpack.c.l.b16 %v1948
        %v2119 = vunpack.c.l.b16 %v1949
        %v2120 = vunpack.c.l.b16 %v1950
        %v2121 = vunpack.c.l.b16 %v1951
        %v2122 = vunpack.c.l.b16 %v1952
        %v2123 = vunpack.c.l.b16 %v1953
        %v2124 = vunpack.c.l.b16 %v1954
        %v2125 = vunpack.c.l.b16 %v1955
        %v2126 = vunpack.c.l.b16 %v1956
        %v2127 = vunpack.c.l.b16 %v1957
        %v2128 = vunpack.c.l.b16 %v1958
        %v2129 = vunpack.c.l.b16 %v1959
        %v2130 = vpack.c.b16 %v2115, %v2114
        %v2131 = vpack.c.b16 %v2117, %v2116
        %v2132 = vpack.c.b16 %v2119, %v2118
        %v2133 = vpack.c.b16 %v2121, %v2120
        %v2134 = vpack.c.b16 %v2123, %v2122
        %v2135 = vpack.c.b16 %v2125, %v2124
        %v2136 = vpack.c.b16 %v2127, %v2126
        %v2137 = vpack.c.b16 %v2129, %v2128
        %2138 = vrot.lane.b32.xlu0 %v2130, 104
        %v2139 = vpop.permute.xlu0 %2138
        %2140 = vrot.lane.b32.xlu0 %v2131, 104
        %v2141 = vpop.permute.xlu0 %2140
        %2142 = vrot.lane.b32.xlu0 %v2132, 104
        %v2143 = vpop.permute.xlu0 %2142
        %2144 = vrot.lane.b32.xlu0 %v2133, 104
        %v2145 = vpop.permute.xlu0 %2144
        %2146 = vrot.lane.b32.xlu0 %v2134, 104
        %v2147 = vpop.permute.xlu0 %2146
        %2148 = vrot.lane.b32.xlu0 %v2135, 104
        %v2149 = vpop.permute.xlu0 %2148
        %2150 = vrot.lane.b32.xlu0 %v2136, 104
        %v2151 = vpop.permute.xlu0 %2150
        %2152 = vrot.lane.b32.xlu0 %v2137, 104
        %v2153 = vpop.permute.xlu0 %2152
        %2162 = vmatprep.subr.bf16.mxu0 0
        %2163 = vmatpush1.bf16.msra.mxu0 %v2153
        %2164 = vmatprep.subr.bf16.mxu0 0
        %2165 = vmatpush1.bf16.msra.mxu0 %v2151
        %2166 = vmatprep.subr.bf16.mxu0 0
        %2167 = vmatpush1.bf16.msra.mxu0 %v2149
        %2168 = vmatprep.subr.bf16.mxu0 0
        %2169 = vmatpush1.bf16.msra.mxu0 %v2147
        %2170 = vmatprep.subr.bf16.mxu0 0
        %2171 = vmatpush1.bf16.msra.mxu0 %v2145
        %2172 = vmatprep.subr.bf16.mxu0 0
        %2173 = vmatpush1.bf16.msra.mxu0 %v2143
        %2174 = vmatprep.subr.bf16.mxu0 0
        %2175 = vmatpush1.bf16.msra.mxu0 %v2141
        %2176 = vmatprep.subr.bf16.mxu0 0
        %2177 = vmatpush1.bf16.msra.mxu0 %v2139
        %2178 = vmatprep.subr.bf16.mxu0 0
        %2179 = vmatpush2.bf16.msra.mxu0 0
        %2180 = vmatprep.subr.bf16.mxu0 0
        %2181 = vmatpush2.bf16.msra.mxu0 0
        %2182 = vmatprep.subr.bf16.mxu0 0
        %2183 = vmatpush2.bf16.msra.mxu0 0
        %2184 = vmatprep.subr.bf16.mxu0 0
        %2185 = vmatpush2.bf16.msra.mxu0 0
        %2186 = vmatprep.subr.bf16.mxu0 0
        %2187 = vmatpush2.bf16.msra.mxu0 0
        %2188 = vmatprep.subr.bf16.mxu0 0
        %2189 = vmatpush2.bf16.msra.mxu0 0
        %2190 = vmatprep.subr.bf16.mxu0 0
        %2191 = vmatpush2.bf16.msra.mxu0 0
        %2192 = vmatprep.subr.bf16.mxu0 0
        %2193 = vmatpush2.bf16.msra.mxu0 0
        %2194 = vmatprep.mubr.bf16.mxu0 0
        %2195 = vmatmul.mubr.bf16.gmra.mxu0 %v2097
        %v2196 = vpop.f32.mrf.mxu0
        %v2197 = vadd.f32 0.0, %v2196
        %v2198 = vpop.f32.mrf.mxu0
        %v2199 = vpop.f32.mrf.mxu0
        %v2200 = vpop.f32.mrf.mxu0
        %2201 = vdwg.mxu0
        %2203 = vrot.lane.b32.xlu0 %v2197, 24
        %v2204 = vpop.permute.xlu0 %2203
        %vm2206 = vcmask 261312
        %2207 = vst.msk [vmem:[#allocation4] sm:$0xff] %vm2206, %v2204
        %v2208 = vld [vmem:[#allocation4] sm:$0xff]
        %v2209 = vpack.c.bf16 %v2208, %v2208
        %v2210 = vld [vmem:[%s9] sm:$0xf]
        %v2211 = vld [vmem:[%s9 + $0x4] sm:$0xf]
        %v2212 = vld [vmem:[%s9 + $0x8] sm:$0xf]
        %v2213 = vld [vmem:[%s9 + $0xc] sm:$0xf]
        %v2214 = vld [vmem:[%s10] sm:$0x1]
        %v2216 = vlaneseq
        %v2217 = vshrl.u32 %v2216, 7
        %v2218 = vsub.s32 0, %v2217
        %v2219 = vrot.slane %v2214, %v2218
        %v2225 = vunpack.c.l.b16 %v2210
        %v2226 = vunpack.c.l.b16 %v2211
        %v2227 = vunpack.c.l.b16 %v2212
        %v2228 = vunpack.c.l.b16 %v2213
        %v2229 = vpack.c.b16 %v2226, %v2225
        %v2230 = vpack.c.b16 %v2228, %v2227
        %v2234 = vsel %vm1078, %v2209, 0
        %2236 = vmatprep.subr.bf16.mxu0 0
        %2237 = vmatpush1.bf16.msra.mxu0 0
        %2238 = vmatprep.subr.bf16.mxu0 0
        %2239 = vmatpush1.bf16.msra.mxu0 0
        %2240 = vmatprep.subr.bf16.mxu0 0
        %2241 = vmatpush1.bf16.msra.mxu0 0
        %2242 = vmatprep.subr.bf16.mxu0 0
        %2243 = vmatpush1.bf16.msra.mxu0 0
        %2244 = vmatprep.subr.bf16.mxu0 0
        %2245 = vmatpush1.bf16.msra.mxu0 0
        %2246 = vmatprep.subr.bf16.mxu0 0
        %2247 = vmatpush1.bf16.msra.mxu0 0
        %2248 = vmatprep.subr.bf16.mxu0 0
        %2249 = vmatpush1.bf16.msra.mxu0 %v2230
        %2250 = vmatprep.subr.bf16.mxu0 0
        %2251 = vmatpush1.bf16.msra.mxu0 %v2229
        %2252 = vmatprep.subr.bf16.mxu0 0
        %2253 = vmatpush2.bf16.msra.mxu0 0
        %2254 = vmatprep.subr.bf16.mxu0 0
        %2255 = vmatpush2.bf16.msra.mxu0 0
        %2256 = vmatprep.subr.bf16.mxu0 0
        %2257 = vmatpush2.bf16.msra.mxu0 0
        %2258 = vmatprep.subr.bf16.mxu0 0
        %2259 = vmatpush2.bf16.msra.mxu0 0
        %2260 = vmatprep.subr.bf16.mxu0 0
        %2261 = vmatpush2.bf16.msra.mxu0 0
        %2262 = vmatprep.subr.bf16.mxu0 0
        %2263 = vmatpush2.bf16.msra.mxu0 0
        %2264 = vmatprep.subr.bf16.mxu0 0
        %2265 = vmatpush2.bf16.msra.mxu0 0
        %2266 = vmatprep.subr.bf16.mxu0 0
        %2267 = vmatpush2.bf16.msra.mxu0 0
        %2268 = vmatprep.mubr.bf16.mxu0 0
        %2269 = vmatmul.mubr.bf16.gmra.mxu0 %v2234
        %v2270 = vpop.f32.mrf.mxu0
        %v2271 = vadd.f32 %v2219, %v2270
        %v2272 = vpop.f32.mrf.mxu0
        %v2273 = vpop.f32.mrf.mxu0
        %v2274 = vpop.f32.mrf.mxu0
        %2275 = vdwg.mxu0
        %2276 = vst.msk [vmem:[%s462] sm:$0xff] %vm1078, %v2271
        %s2277 = sand.u32 %s300, 1
        %s2278 = scalar_lea.sflag [#allocation6], %s2277
        %s2279 = sand.u32 %s300, 1
        %s2280 = smul.addr %s2279, 8
        %s2281 = scalar_lea.vmem [#allocation5], %s2280
        %s2282 = sand.u32 %s328, 1
        %s2283 = scalar_lea.sflag [#allocation8], %s2282
        %s2284 = sand.u32 %s328, 1
        %s2285 = smul.addr %s2284, 32
        %s2286 = scalar_lea.vmem [#allocation7], %s2285
        // Predicated region
        $region69: #{temporal_attention_layer.1} parent=63 // pred_check
          %p2287 = pneg %p310
        $region70: #{temporal_attention_layer.1} parent=63 // pred_check_branch
          %2289 = sbr.rel (%p2287) target = $region72
        $region71: #{temporal_attention_layer.1} parent=63 // pred_region
          %s2291 = ssub.s32 128, 128
          %2292 = vsyncadd %s2278, %s2291
          %s2293 = sadd.s32 %s35, %s34
          %s2294 = smul.addr %s2293, 128
          %s2295 = scalar_lea.hbm %s11, %s2294
          %s2297 = sshll.u32 %s2281, 4
          %s2298 = int_to_ptr.vmem [resolvable:$true] %s2297
          %2300 = dma.vmem_to_hbm [thread:$0]  %s2298, 128, %s2295, %s2278
        $region72: #{temporal_attention_layer.1} parent=63 // pred_fallthru
          _
        // Predicated region
        $region73: #{temporal_attention_layer.1} parent=63 // pred_check
          %p2301 = pneg %p338
        $region74: #{temporal_attention_layer.1} parent=63 // pred_check_branch
          %2303 = sbr.rel (%p2301) target = $region76
        $region75: #{temporal_attention_layer.1} parent=63 // pred_region
          %s2305 = ssub.s32 512, 512
          %2306 = vsyncadd %s2283, %s2305
          %s2307 = smul.addr %s34, 4
          %s2308 = sadd.s32 %s35, %s2307
          %s2309 = smul.addr %s2308, 128
          %s2310 = scalar_lea.hbm %s12, %s2309
          %s2311 = sshll.u32 %s2286, 4
          %s2312 = int_to_ptr.vmem [resolvable:$true] %s2311
          %2317 = dma.vmem_to_hbm [thread:$0]  %s2312, 512, %s2310, %s2283, 128, 128, 8
        $region76: #{temporal_attention_layer.1} parent=63 // pred_fallthru
          _
      $region64: #{temporal_attention_layer.1} parent=5 // pred_fallthru
        _
      %p2318 = scmp.le.s32.totalorder 2, %s25
      // Predicated region
      $region77: #{temporal_attention_layer.1} parent=5 // pred_check
        %p2319 = pneg %p2318
      $region78: #{temporal_attention_layer.1} parent=5 // pred_check_branch
        %2321 = sbr.rel (%p2319) target = $region80
      $region79: #{temporal_attention_layer.1} parent=5 // pred_region
        %s2322 = ssub.s32 %s25, 2
        // Predicated region
        $region81: #{temporal_attention_layer.1} parent=79 // pred_check
          %p2323 = pneg %p316
        $region82: #{temporal_attention_layer.1} parent=79 // pred_check_branch
          %2325 = sbr.rel (%p2323) target = $region84
        $region83: #{temporal_attention_layer.1} parent=79 // pred_region
          %s2326 = sand.u32 %s301, 1
          %s2327 = scalar_lea.sflag [#allocation6], %s2326
          %s2328 = sand.u32 %s301, 1
          %s2329 = smul.addr %s2328, 8
          %s2330 = scalar_lea.vmem [#allocation5], %s2329
          %2331 = dma.done %s2327, 128
        $region84: #{temporal_attention_layer.1} parent=79 // pred_fallthru
          _
        // Predicated region
        $region85: #{temporal_attention_layer.1} parent=79 // pred_check
          %p2332 = pneg %p344
        $region86: #{temporal_attention_layer.1} parent=79 // pred_check_branch
          %2334 = sbr.rel (%p2332) target = $region88
        $region87: #{temporal_attention_layer.1} parent=79 // pred_region
          %s2335 = sand.u32 %s329, 1
          %s2336 = scalar_lea.sflag [#allocation8], %s2335
          %s2337 = sand.u32 %s329, 1
          %s2338 = smul.addr %s2337, 32
          %s2339 = scalar_lea.vmem [#allocation7], %s2338
          %2340 = dma.done %s2336, 512
        $region88: #{temporal_attention_layer.1} parent=79 // pred_fallthru
          _
      $region80: #{temporal_attention_layer.1} parent=5 // pred_fallthru
        _
    $region6: #{temporal_attention_layer.1} parent=1 // loop_footer
      %s29 = sadd.s32 1, %s25
    $region7: #{temporal_attention_layer.1} parent=1 // loop_footer_branch
      %24 = sbr.rel target = $region3
    $region8: #{temporal_attention_layer.1} parent=1 // loop_exit
      _
    %2341 = vsyncpa [#allocation6], 1
    %s2342 = scalar_lea.sflag [#allocation6], 1
    %2343 = vsyncpa %s2342, 1
    %2344 = vsyncpa [#allocation8], 1
    %s2345 = scalar_lea.sflag [#allocation8], 1
    %2346 = vsyncpa %s2345, 1

</llo_original>
